<compile_context>
chip_gen: v5e
topology: v5e:2x2
jax: 0.10.0
libtpu: 0.0.40
codegen_flags: <defaults>
</compile_context>

<pallas_src>
import numpy as np
import jax
import jax.numpy as jnp
from jax.experimental import pallas as pl
from jax.experimental.pallas import tpu as pltpu


# ---------------- fused Pallas kernel ----------------

def _mnist_fused_kernel(x_ref, a1_ref, a2_ref, a3_ref,
                        b1_ref, b2_ref, b3_ref, pool_ref, o_ref):
    f32 = jnp.float32

    def conv_relu(act, a_ref, b_ref, H, W, Cin, Cout):
        # act: (TB, H, W*Cin) f32; last dim is (w, c) flattened (NHWC row layout).
        TB = act.shape[0]
        Ho, Wo = (H + 1) // 2, (W + 1) // 2
        WC, N = W * Cin, Wo * Cout
        # Zero-pad rows so p[r] == conv-padded input row r, r in [0, 2*Ho+1].
        parts = [jnp.zeros((TB, 1, WC), act.dtype), act]
        extra = 2 * Ho + 1 - H
        if extra:
            parts.append(jnp.zeros((TB, extra, WC), act.dtype))
        p = jnp.concatenate(parts, axis=1)                 # (TB, 2*Ho+2, WC)
        # Row-parity split -> the three stride-2 row taps become contiguous slices.
        p = p.reshape(TB, Ho + 1, 2, WC)
        even, odd = p[:, :, 0, :], p[:, :, 1, :]           # rows 2q / 2q+1
        g0 = even[:, 0:Ho, :].reshape(TB * Ho, WC)         # ki = 0
        g1 = odd[:, 0:Ho, :].reshape(TB * Ho, WC)          # ki = 1
        g2 = even[:, 1:Ho + 1, :].reshape(TB * Ho, WC)     # ki = 2
        # Column taps + width padding are folded into a_ref[ki]: (W*Cin, Wo*Cout), bf16.
        acc = jnp.dot(g0.astype(jnp.bfloat16), a_ref[0], preferred_element_type=f32)
        acc = acc + jnp.dot(g1.astype(jnp.bfloat16), a_ref[1], preferred_element_type=f32)
        acc = acc + jnp.dot(g2.astype(jnp.bfloat16), a_ref[2], preferred_element_type=f32)
        acc = jnp.maximum(acc + b_ref[...], 0.0)           # bias + ReLU in f32
        return acc.reshape(TB, Ho, N)

    x = x_ref[...].astype(f32)                              # (TB, 28, 28)
    y1 = conv_relu(x, a1_ref, b1_ref, 28, 28, 1, 16)        # (TB, 14, 14*16)
    y2 = conv_relu(y1, a2_ref, b2_ref, 14, 14, 16, 16)      # (TB, 7, 7*16)
    y3 = conv_relu(y2, a3_ref, b3_ref, 7, 7, 16, 10)        # (TB, 4, 4*10)
    # avg_pool2d(4) + flatten epilogue: sum over the 4 output rows, then a constant
    # (40, 10) matrix carries the 1/16 and the sum over the 4 output columns.
    s = jnp.sum(y3, axis=1)                                 # (TB, 40)
    o_ref[...] = jnp.dot(s, pool_ref[...], preferred_element_type=f32)


# ---------------- host-side weight folding (done once) ----------------

def _fold_conv_weight(w, w_in, stride=2, pad=1):
    # w: (Cout, Cin, 3, 3) PyTorch layout  ->  A[ki]: (W*Cin, Wo*Cout) with
    # A[ki][(wi*Cin+ci), (wo*Cout+co)] = sum_{kj: 2*wo+kj-1 == wi} w[co, ci, ki, kj]
    w = np.asarray(w, dtype=np.float32)
    cout, cin, kh, kw = w.shape
    wo_dim = (w_in + 2 * pad - kw) // stride + 1
    a = np.zeros((kh, w_in * cin, wo_dim * cout), np.float32)
    for ki in range(kh):
        for kj in range(kw):
            for wo in range(wo_dim):
                wi = stride * wo + kj - pad
                if 0 <= wi < w_in:
                    a[ki, wi * cin:(wi + 1) * cin, wo * cout:(wo + 1) * cout] += w[:, :, ki, kj].T
    return a


def prepare_params(params):
    a1 = jnp.asarray(_fold_conv_weight(params["w1"], 28), jnp.bfloat16)  # (3, 28, 224)
    a2 = jnp.asarray(_fold_conv_weight(params["w2"], 14), jnp.bfloat16)  # (3, 224, 112)
    a3 = jnp.asarray(_fold_conv_weight(params["w3"], 7), jnp.bfloat16)   # (3, 112, 40)
    b1 = jnp.tile(jnp.asarray(params["b1"], jnp.float32), 14).reshape(1, -1)  # (1, 224)
    b2 = jnp.tile(jnp.asarray(params["b2"], jnp.float32), 7).reshape(1, -1)   # (1, 112)
    b3 = jnp.tile(jnp.asarray(params["b3"], jnp.float32), 4).reshape(1, -1)   # (1, 40)
    pool = jnp.asarray(np.tile(np.eye(10, dtype=np.float32) / 16.0, (4, 1)))  # (40, 10)
    return dict(a1=a1, a2=a2, a3=a3, b1=b1, b2=b2, b3=b3, pool=pool)


# ---------------- wrapper ----------------

def _batch_tile(B):
    return 8 if B % 8 == 0 else B


def _const_spec(arr):
    n = arr.ndim
    return pl.BlockSpec(arr.shape, lambda i, n=n: (0,) * n)


def mnist_cnn_forward(x, folded):
    x = x.reshape(-1, 28, 28).astype(jnp.float32)
    B = x.shape[0]
    TB = _batch_tile(B)
    return pl.pallas_call(
        _mnist_fused_kernel,
        out_shape=jax.ShapeDtypeStruct((B, 10), jnp.float32),
        grid=(B // TB,),
        in_specs=[
            pl.BlockSpec((TB, 28, 28), lambda i: (i, 0, 0)),
            _const_spec(folded["a1"]),
            _const_spec(folded["a2"]),
            _const_spec(folded["a3"]),
            _const_spec(folded["b1"]),
            _const_spec(folded["b2"]),
            _const_spec(folded["b3"]),
            _const_spec(folded["pool"]),
        ],
        out_specs=pl.BlockSpec((TB, 10), lambda i: (i, 0)),
        compiler_params=pltpu.CompilerParams(dimension_semantics=("parallel",)),
    )(x, folded["a1"], folded["a2"], folded["a3"],
      folded["b1"], folded["b2"], folded["b3"], folded["pool"])


# ---------------- pure-JAX reference (for numerical check) ----------------

def reference_forward(x, params):
    x = x.reshape(-1, 1, 28, 28).astype(jnp.float32)

    def conv(v, w, b):
        y = jax.lax.conv_general_dilated(
            v, w, window_strides=(2, 2), padding=((1, 1), (1, 1)),
            dimension_numbers=("NCHW", "OIHW", "NCHW"))
        return jnp.maximum(y + b[None, :, None, None], 0.0)

    x = conv(x, params["w1"], params["b1"])
    x = conv(x, params["w2"], params["b2"])
    x = conv(x, params["w3"], params["b3"])
    return jnp.mean(x, axis=(2, 3))  # avg_pool2d(4) on 4x4 + view -> (B, 10)


# ---------------- deterministic parameter init ----------------

def init_params(key):
    def conv_init(key, cout, cin, k):
        kw_, kb_ = jax.random.split(key)
        fan_in = cin * k * k
        bound = 1.0 / jnp.sqrt(fan_in)
        w = jax.random.uniform(kw_, (cout, cin, k, k), jnp.float32, -bound, bound)
        b = jax.random.uniform(kb_, (cout,), jnp.float32, -bound, bound)
        return w, b

    k1, k2, k3 = jax.random.split(key, 3)
    w1, b1 = conv_init(k1, 16, 1, 3)
    w2, b2 = conv_init(k2, 16, 16, 3)
    w3, b3 = conv_init(k3, 10, 16, 3)
    return {"w1": w1, "b1": b1, "w2": w2, "b2": b2, "w3": w3, "b3": b3}


if __name__ == "__main__":
    key = jax.random.PRNGKey(0)
    kx, kp = jax.random.split(key)
    x = jax.random.normal(kx, (2, 1, 28, 28), dtype=jnp.float32)
    params = init_params(kp)
    folded = prepare_params(params)

    out = mnist_cnn_forward(x, folded)
    out = jax.block_until_ready(out)
    assert out.shape == (2, 10), out.shape

    ref = jax.block_until_ready(reference_forward(x, params))
    assert np.allclose(np.asarray(out), np.asarray(ref), atol=3e-2, rtol=3e-2), (
        float(np.max(np.abs(np.asarray(out) - np.asarray(ref)))))
    print("KERNEL_OK")
</pallas_src>

<mosaic_0001>
module attributes {stable_mosaic.version = 11 : i64} {
  func.func @_mnist_fused_kernel(%arg0: i32, %arg1: memref<2x28x28xf32, #tpu.memory_space<vmem>>, %arg2: memref<3x28x224xbf16, #tpu.memory_space<vmem>>, %arg3: memref<3x224x112xbf16, #tpu.memory_space<vmem>>, %arg4: memref<3x112x40xbf16, #tpu.memory_space<vmem>>, %arg5: memref<1x224xf32, #tpu.memory_space<vmem>>, %arg6: memref<1x112xf32, #tpu.memory_space<vmem>>, %arg7: memref<1x40xf32, #tpu.memory_space<vmem>>, %arg8: memref<40x10xf32, #tpu.memory_space<vmem>>, %arg9: memref<2x10xf32, #tpu.memory_space<vmem>>) attributes {dimension_semantics = [#tpu.dimension_semantics<parallel>], iteration_bounds = array<i64: 1>, scalar_prefetch = 0 : i64, scratch_operands = 0 : i64, tpu.core_type = #tpu.core_type<tc>, window_params = [{transform_indices = @transform_0, window_bounds = array<i64: 2, 28, 28>}, {pipeline_mode = #tpu.pipeline_mode<synchronous>, transform_indices = @transform_1, window_bounds = array<i64: 3, 28, 224>}, {pipeline_mode = #tpu.pipeline_mode<synchronous>, transform_indices = @transform_2, window_bounds = array<i64: 3, 224, 112>}, {pipeline_mode = #tpu.pipeline_mode<synchronous>, transform_indices = @transform_3, window_bounds = array<i64: 3, 112, 40>}, {pipeline_mode = #tpu.pipeline_mode<synchronous>, transform_indices = @transform_4, window_bounds = array<i64: 1, 224>}, {pipeline_mode = #tpu.pipeline_mode<synchronous>, transform_indices = @transform_5, window_bounds = array<i64: 1, 112>}, {pipeline_mode = #tpu.pipeline_mode<synchronous>, transform_indices = @transform_6, window_bounds = array<i64: 1, 40>}, {pipeline_mode = #tpu.pipeline_mode<synchronous>, transform_indices = @transform_7, window_bounds = array<i64: 40, 10>}, {transform_indices = @transform_8, window_bounds = array<i64: 2, 10>}]} {
    %c0 = arith.constant 0 : index
    %c0_0 = arith.constant 0 : index
    %c0_1 = arith.constant 0 : index
    %0 = vector.load %arg1[%c0, %c0_0, %c0_1] : memref<2x28x28xf32, #tpu.memory_space<vmem>>, vector<2x28x28xf32>
    %cst = arith.constant 0.000000e+00 : f32
    %1 = vector.broadcast %cst : f32 to vector<2x1x28xf32>
    %cst_2 = arith.constant 0.000000e+00 : f32
    %2 = vector.broadcast %cst_2 : f32 to vector<2x1x28xf32>
    %3 = tpu.concatenate %1, %0, %2 in 1 : vector<2x1x28xf32>, vector<2x28x28xf32>, vector<2x1x28xf32> -> vector<2x30x28xf32>
    %4 = vector.shape_cast %3 : vector<2x30x28xf32> to vector<2x15x2x28xf32>
    %5 = vector.extract_strided_slice %4 {offsets = [0, 0, 0, 0], sizes = [2, 15, 1, 28], strides = [1, 1, 1, 1]} : vector<2x15x2x28xf32> to vector<2x15x1x28xf32>
    %6 = vector.shape_cast %5 : vector<2x15x1x28xf32> to vector<2x15x28xf32>
    %7 = vector.extract_strided_slice %4 {offsets = [0, 0, 1, 0], sizes = [2, 15, 1, 28], strides = [1, 1, 1, 1]} : vector<2x15x2x28xf32> to vector<2x15x1x28xf32>
    %8 = vector.shape_cast %7 : vector<2x15x1x28xf32> to vector<2x15x28xf32>
    %9 = vector.extract_strided_slice %6 {offsets = [0, 0, 0], sizes = [2, 14, 28], strides = [1, 1, 1]} : vector<2x15x28xf32> to vector<2x14x28xf32>
    %10 = vector.shape_cast %9 : vector<2x14x28xf32> to vector<28x28xf32>
    %11 = vector.extract_strided_slice %8 {offsets = [0, 0, 0], sizes = [2, 14, 28], strides = [1, 1, 1]} : vector<2x15x28xf32> to vector<2x14x28xf32>
    %12 = vector.shape_cast %11 : vector<2x14x28xf32> to vector<28x28xf32>
    %13 = vector.extract_strided_slice %6 {offsets = [0, 1, 0], sizes = [2, 14, 28], strides = [1, 1, 1]} : vector<2x15x28xf32> to vector<2x14x28xf32>
    %14 = vector.shape_cast %13 : vector<2x14x28xf32> to vector<28x28xf32>
    %15 = arith.truncf %10 : vector<28x28xf32> to vector<28x28xbf16>
    %c0_3 = arith.constant 0 : index
    %c0_4 = arith.constant 0 : index
    %c0_5 = arith.constant 0 : index
    %16 = vector.load %arg2[%c0_3, %c0_4, %c0_5] : memref<3x28x224xbf16, #tpu.memory_space<vmem>>, vector<1x28x224xbf16>
    %17 = vector.shape_cast %16 : vector<1x28x224xbf16> to vector<28x224xbf16>
    %cst_6 = arith.constant dense<0.000000e+00> : vector<28x224xf32>
    %18 = tpu.matmul %15, %17, %cst_6 {dimension_numbers = #tpu.dot_dimension_numbers<[1], [0], [0], [1], [0, 0, 1, 1], [], []>} : vector<28x28xbf16>, vector<28x224xbf16>, vector<28x224xf32> -> vector<28x224xf32>
    %19 = arith.truncf %12 : vector<28x28xf32> to vector<28x28xbf16>
    %c1 = arith.constant 1 : index
    %c0_7 = arith.constant 0 : index
    %c0_8 = arith.constant 0 : index
    %20 = vector.load %arg2[%c1, %c0_7, %c0_8] : memref<3x28x224xbf16, #tpu.memory_space<vmem>>, vector<1x28x224xbf16>
    %21 = vector.shape_cast %20 : vector<1x28x224xbf16> to vector<28x224xbf16>
    %cst_9 = arith.constant dense<0.000000e+00> : vector<28x224xf32>
    %22 = tpu.matmul %19, %21, %cst_9 {dimension_numbers = #tpu.dot_dimension_numbers<[1], [0], [0], [1], [0, 0, 1, 1], [], []>} : vector<28x28xbf16>, vector<28x224xbf16>, vector<28x224xf32> -> vector<28x224xf32>
    %23 = arith.addf %18, %22 : vector<28x224xf32>
    %24 = arith.truncf %14 : vector<28x28xf32> to vector<28x28xbf16>
    %c2 = arith.constant 2 : index
    %c0_10 = arith.constant 0 : index
    %c0_11 = arith.constant 0 : index
    %25 = vector.load %arg2[%c2, %c0_10, %c0_11] : memref<3x28x224xbf16, #tpu.memory_space<vmem>>, vector<1x28x224xbf16>
    %26 = vector.shape_cast %25 : vector<1x28x224xbf16> to vector<28x224xbf16>
    %cst_12 = arith.constant dense<0.000000e+00> : vector<28x224xf32>
    %27 = tpu.matmul %24, %26, %cst_12 {dimension_numbers = #tpu.dot_dimension_numbers<[1], [0], [0], [1], [0, 0, 1, 1], [], []>} : vector<28x28xbf16>, vector<28x224xbf16>, vector<28x224xf32> -> vector<28x224xf32>
    %28 = arith.addf %23, %27 : vector<28x224xf32>
    %c0_13 = arith.constant 0 : index
    %c0_14 = arith.constant 0 : index
    %29 = vector.load %arg5[%c0_13, %c0_14] : memref<1x224xf32, #tpu.memory_space<vmem>>, vector<1x224xf32>
    %30 = vector.broadcast %29 : vector<1x224xf32> to vector<28x224xf32>
    %31 = arith.addf %28, %30 : vector<28x224xf32>
    %cst_15 = arith.constant 0.000000e+00 : f32
    %32 = vector.broadcast %cst_15 : f32 to vector<28x224xf32>
    %33 = arith.maximumf %31, %32 : vector<28x224xf32>
    %34 = vector.shape_cast %33 : vector<28x224xf32> to vector<2x14x224xf32>
    %cst_16 = arith.constant 0.000000e+00 : f32
    %35 = vector.broadcast %cst_16 : f32 to vector<2x1x224xf32>
    %cst_17 = arith.constant 0.000000e+00 : f32
    %36 = vector.broadcast %cst_17 : f32 to vector<2x1x224xf32>
    %37 = tpu.concatenate %35, %34, %36 in 1 : vector<2x1x224xf32>, vector<2x14x224xf32>, vector<2x1x224xf32> -> vector<2x16x224xf32>
    %38 = vector.shape_cast %37 : vector<2x16x224xf32> to vector<2x8x2x224xf32>
    %39 = vector.extract_strided_slice %38 {offsets = [0, 0, 0, 0], sizes = [2, 8, 1, 224], strides = [1, 1, 1, 1]} : vector<2x8x2x224xf32> to vector<2x8x1x224xf32>
    %40 = vector.shape_cast %39 : vector<2x8x1x224xf32> to vector<2x8x224xf32>
    %41 = vector.extract_strided_slice %38 {offsets = [0, 0, 1, 0], sizes = [2, 8, 1, 224], strides = [1, 1, 1, 1]} : vector<2x8x2x224xf32> to vector<2x8x1x224xf32>
    %42 = vector.shape_cast %41 : vector<2x8x1x224xf32> to vector<2x8x224xf32>
    %43 = vector.extract_strided_slice %40 {offsets = [0, 0, 0], sizes = [2, 7, 224], strides = [1, 1, 1]} : vector<2x8x224xf32> to vector<2x7x224xf32>
    %44 = vector.shape_cast %43 : vector<2x7x224xf32> to vector<14x224xf32>
    %45 = vector.extract_strided_slice %42 {offsets = [0, 0, 0], sizes = [2, 7, 224], strides = [1, 1, 1]} : vector<2x8x224xf32> to vector<2x7x224xf32>
    %46 = vector.shape_cast %45 : vector<2x7x224xf32> to vector<14x224xf32>
    %47 = vector.extract_strided_slice %40 {offsets = [0, 1, 0], sizes = [2, 7, 224], strides = [1, 1, 1]} : vector<2x8x224xf32> to vector<2x7x224xf32>
    %48 = vector.shape_cast %47 : vector<2x7x224xf32> to vector<14x224xf32>
    %49 = arith.truncf %44 : vector<14x224xf32> to vector<14x224xbf16>
    %c0_18 = arith.constant 0 : index
    %c0_19 = arith.constant 0 : index
    %c0_20 = arith.constant 0 : index
    %50 = vector.load %arg3[%c0_18, %c0_19, %c0_20] : memref<3x224x112xbf16, #tpu.memory_space<vmem>>, vector<1x224x112xbf16>
    %51 = vector.shape_cast %50 : vector<1x224x112xbf16> to vector<224x112xbf16>
    %cst_21 = arith.constant dense<0.000000e+00> : vector<14x112xf32>
    %52 = tpu.matmul %49, %51, %cst_21 {dimension_numbers = #tpu.dot_dimension_numbers<[1], [0], [0], [1], [0, 0, 1, 1], [], []>} : vector<14x224xbf16>, vector<224x112xbf16>, vector<14x112xf32> -> vector<14x112xf32>
    %53 = arith.truncf %46 : vector<14x224xf32> to vector<14x224xbf16>
    %c1_22 = arith.constant 1 : index
    %c0_23 = arith.constant 0 : index
    %c0_24 = arith.constant 0 : index
    %54 = vector.load %arg3[%c1_22, %c0_23, %c0_24] : memref<3x224x112xbf16, #tpu.memory_space<vmem>>, vector<1x224x112xbf16>
    %55 = vector.shape_cast %54 : vector<1x224x112xbf16> to vector<224x112xbf16>
    %cst_25 = arith.constant dense<0.000000e+00> : vector<14x112xf32>
    %56 = tpu.matmul %53, %55, %cst_25 {dimension_numbers = #tpu.dot_dimension_numbers<[1], [0], [0], [1], [0, 0, 1, 1], [], []>} : vector<14x224xbf16>, vector<224x112xbf16>, vector<14x112xf32> -> vector<14x112xf32>
    %57 = arith.addf %52, %56 : vector<14x112xf32>
    %58 = arith.truncf %48 : vector<14x224xf32> to vector<14x224xbf16>
    %c2_26 = arith.constant 2 : index
    %c0_27 = arith.constant 0 : index
    %c0_28 = arith.constant 0 : index
    %59 = vector.load %arg3[%c2_26, %c0_27, %c0_28] : memref<3x224x112xbf16, #tpu.memory_space<vmem>>, vector<1x224x112xbf16>
    %60 = vector.shape_cast %59 : vector<1x224x112xbf16> to vector<224x112xbf16>
    %cst_29 = arith.constant dense<0.000000e+00> : vector<14x112xf32>
    %61 = tpu.matmul %58, %60, %cst_29 {dimension_numbers = #tpu.dot_dimension_numbers<[1], [0], [0], [1], [0, 0, 1, 1], [], []>} : vector<14x224xbf16>, vector<224x112xbf16>, vector<14x112xf32> -> vector<14x112xf32>
    %62 = arith.addf %57, %61 : vector<14x112xf32>
    %c0_30 = arith.constant 0 : index
    %c0_31 = arith.constant 0 : index
    %63 = vector.load %arg6[%c0_30, %c0_31] : memref<1x112xf32, #tpu.memory_space<vmem>>, vector<1x112xf32>
    %64 = vector.broadcast %63 : vector<1x112xf32> to vector<14x112xf32>
    %65 = arith.addf %62, %64 : vector<14x112xf32>
    %cst_32 = arith.constant 0.000000e+00 : f32
    %66 = vector.broadcast %cst_32 : f32 to vector<14x112xf32>
    %67 = arith.maximumf %65, %66 : vector<14x112xf32>
    %68 = vector.shape_cast %67 : vector<14x112xf32> to vector<2x7x112xf32>
    %cst_33 = arith.constant 0.000000e+00 : f32
    %69 = vector.broadcast %cst_33 : f32 to vector<2x1x112xf32>
    %cst_34 = arith.constant 0.000000e+00 : f32
    %70 = vector.broadcast %cst_34 : f32 to vector<2x2x112xf32>
    %71 = tpu.concatenate %69, %68, %70 in 1 : vector<2x1x112xf32>, vector<2x7x112xf32>, vector<2x2x112xf32> -> vector<2x10x112xf32>
    %72 = vector.shape_cast %71 : vector<2x10x112xf32> to vector<2x5x2x112xf32>
    %73 = vector.extract_strided_slice %72 {offsets = [0, 0, 0, 0], sizes = [2, 5, 1, 112], strides = [1, 1, 1, 1]} : vector<2x5x2x112xf32> to vector<2x5x1x112xf32>
    %74 = vector.shape_cast %73 : vector<2x5x1x112xf32> to vector<2x5x112xf32>
    %75 = vector.extract_strided_slice %72 {offsets = [0, 0, 1, 0], sizes = [2, 5, 1, 112], strides = [1, 1, 1, 1]} : vector<2x5x2x112xf32> to vector<2x5x1x112xf32>
    %76 = vector.shape_cast %75 : vector<2x5x1x112xf32> to vector<2x5x112xf32>
    %77 = vector.extract_strided_slice %74 {offsets = [0, 0, 0], sizes = [2, 4, 112], strides = [1, 1, 1]} : vector<2x5x112xf32> to vector<2x4x112xf32>
    %78 = vector.shape_cast %77 : vector<2x4x112xf32> to vector<8x112xf32>
    %79 = vector.extract_strided_slice %76 {offsets = [0, 0, 0], sizes = [2, 4, 112], strides = [1, 1, 1]} : vector<2x5x112xf32> to vector<2x4x112xf32>
    %80 = vector.shape_cast %79 : vector<2x4x112xf32> to vector<8x112xf32>
    %81 = vector.extract_strided_slice %74 {offsets = [0, 1, 0], sizes = [2, 4, 112], strides = [1, 1, 1]} : vector<2x5x112xf32> to vector<2x4x112xf32>
    %82 = vector.shape_cast %81 : vector<2x4x112xf32> to vector<8x112xf32>
    %83 = arith.truncf %78 : vector<8x112xf32> to vector<8x112xbf16>
    %c0_35 = arith.constant 0 : index
    %c0_36 = arith.constant 0 : index
    %c0_37 = arith.constant 0 : index
    %84 = vector.load %arg4[%c0_35, %c0_36, %c0_37] : memref<3x112x40xbf16, #tpu.memory_space<vmem>>, vector<1x112x40xbf16>
    %85 = vector.shape_cast %84 : vector<1x112x40xbf16> to vector<112x40xbf16>
    %cst_38 = arith.constant dense<0.000000e+00> : vector<8x40xf32>
    %86 = tpu.matmul %83, %85, %cst_38 {dimension_numbers = #tpu.dot_dimension_numbers<[1], [0], [0], [1], [0, 0, 1, 1], [], []>} : vector<8x112xbf16>, vector<112x40xbf16>, vector<8x40xf32> -> vector<8x40xf32>
    %87 = arith.truncf %80 : vector<8x112xf32> to vector<8x112xbf16>
    %c1_39 = arith.constant 1 : index
    %c0_40 = arith.constant 0 : index
    %c0_41 = arith.constant 0 : index
    %88 = vector.load %arg4[%c1_39, %c0_40, %c0_41] : memref<3x112x40xbf16, #tpu.memory_space<vmem>>, vector<1x112x40xbf16>
    %89 = vector.shape_cast %88 : vector<1x112x40xbf16> to vector<112x40xbf16>
    %cst_42 = arith.constant dense<0.000000e+00> : vector<8x40xf32>
    %90 = tpu.matmul %87, %89, %cst_42 {dimension_numbers = #tpu.dot_dimension_numbers<[1], [0], [0], [1], [0, 0, 1, 1], [], []>} : vector<8x112xbf16>, vector<112x40xbf16>, vector<8x40xf32> -> vector<8x40xf32>
    %91 = arith.addf %86, %90 : vector<8x40xf32>
    %92 = arith.truncf %82 : vector<8x112xf32> to vector<8x112xbf16>
    %c2_43 = arith.constant 2 : index
    %c0_44 = arith.constant 0 : index
    %c0_45 = arith.constant 0 : index
    %93 = vector.load %arg4[%c2_43, %c0_44, %c0_45] : memref<3x112x40xbf16, #tpu.memory_space<vmem>>, vector<1x112x40xbf16>
    %94 = vector.shape_cast %93 : vector<1x112x40xbf16> to vector<112x40xbf16>
    %cst_46 = arith.constant dense<0.000000e+00> : vector<8x40xf32>
    %95 = tpu.matmul %92, %94, %cst_46 {dimension_numbers = #tpu.dot_dimension_numbers<[1], [0], [0], [1], [0, 0, 1, 1], [], []>} : vector<8x112xbf16>, vector<112x40xbf16>, vector<8x40xf32> -> vector<8x40xf32>
    %96 = arith.addf %91, %95 : vector<8x40xf32>
    %c0_47 = arith.constant 0 : index
    %c0_48 = arith.constant 0 : index
    %97 = vector.load %arg7[%c0_47, %c0_48] : memref<1x40xf32, #tpu.memory_space<vmem>>, vector<1x40xf32>
    %98 = vector.broadcast %97 : vector<1x40xf32> to vector<8x40xf32>
    %99 = arith.addf %96, %98 : vector<8x40xf32>
    %cst_49 = arith.constant 0.000000e+00 : f32
    %100 = vector.broadcast %cst_49 : f32 to vector<8x40xf32>
    %101 = arith.maximumf %99, %100 : vector<8x40xf32>
    %102 = vector.shape_cast %101 : vector<8x40xf32> to vector<2x4x40xf32>
    %cst_50 = arith.constant dense<0.000000e+00> : vector<2x40xf32>
    %103 = vector.multi_reduction <add>, %102, %cst_50 [1] : vector<2x4x40xf32> to vector<2x40xf32>
    %c0_51 = arith.constant 0 : index
    %c0_52 = arith.constant 0 : index
    %104 = vector.load %arg8[%c0_51, %c0_52] : memref<40x10xf32, #tpu.memory_space<vmem>>, vector<40x10xf32>
    %cst_53 = arith.constant dense<0.000000e+00> : vector<2x10xf32>
    %105 = tpu.matmul %103, %104, %cst_53 {dimension_numbers = #tpu.dot_dimension_numbers<[1], [0], [0], [1], [0, 0, 1, 1], [], []>} : vector<2x40xf32>, vector<40x10xf32>, vector<2x10xf32> -> vector<2x10xf32>
    %c0_54 = arith.constant 0 : index
    %c0_55 = arith.constant 0 : index
    %106 = vector.load %arg9[%c0_54, %c0_55] : memref<2x10xf32, #tpu.memory_space<vmem>>, vector<2x10xf32>
    tpu.vector_store %arg9[%c0_54, %c0_55], %105 {strides = array<i32>} : memref<2x10xf32, #tpu.memory_space<vmem>>, vector<2x10xf32>,
    return
  }
  func.func @transform_0(%arg0: i32) -> (i32, i32, i32) {
    %c0_i32 = arith.constant 0 : i32
    %c0_i32_0 = arith.constant 0 : i32
    %c0_i32_1 = arith.constant 0 : i32
    return %arg0, %c0_i32, %c0_i32_0 : i32, i32, i32
  }
  func.func @transform_1(%arg0: i32) -> (i32, i32, i32) {
    %c0_i32 = arith.constant 0 : i32
    %c0_i32_0 = arith.constant 0 : i32
    %c0_i32_1 = arith.constant 0 : i32
    %c0_i32_2 = arith.constant 0 : i32
    return %c0_i32, %c0_i32_0, %c0_i32_1 : i32, i32, i32
  }
  func.func @transform_2(%arg0: i32) -> (i32, i32, i32) {
    %c0_i32 = arith.constant 0 : i32
    %c0_i32_0 = arith.constant 0 : i32
    %c0_i32_1 = arith.constant 0 : i32
    %c0_i32_2 = arith.constant 0 : i32
    return %c0_i32, %c0_i32_0, %c0_i32_1 : i32, i32, i32
  }
  func.func @transform_3(%arg0: i32) -> (i32, i32, i32) {
    %c0_i32 = arith.constant 0 : i32
    %c0_i32_0 = arith.constant 0 : i32
    %c0_i32_1 = arith.constant 0 : i32
    %c0_i32_2 = arith.constant 0 : i32
    return %c0_i32, %c0_i32_0, %c0_i32_1 : i32, i32, i32
  }
  func.func @transform_4(%arg0: i32) -> (i32, i32) {
    %c0_i32 = arith.constant 0 : i32
    %c0_i32_0 = arith.constant 0 : i32
    %c0_i32_1 = arith.constant 0 : i32
    return %c0_i32, %c0_i32_0 : i32, i32
  }
  func.func @transform_5(%arg0: i32) -> (i32, i32) {
    %c0_i32 = arith.constant 0 : i32
    %c0_i32_0 = arith.constant 0 : i32
    %c0_i32_1 = arith.constant 0 : i32
    return %c0_i32, %c0_i32_0 : i32, i32
  }
  func.func @transform_6(%arg0: i32) -> (i32, i32) {
    %c0_i32 = arith.constant 0 : i32
    %c0_i32_0 = arith.constant 0 : i32
    %c0_i32_1 = arith.constant 0 : i32
    return %c0_i32, %c0_i32_0 : i32, i32
  }
  func.func @transform_7(%arg0: i32) -> (i32, i32) {
    %c0_i32 = arith.constant 0 : i32
    %c0_i32_0 = arith.constant 0 : i32
    %c0_i32_1 = arith.constant 0 : i32
    return %c0_i32, %c0_i32_0 : i32, i32
  }
  func.func @transform_8(%arg0: i32) -> (i32, i32) {
    %c0_i32 = arith.constant 0 : i32
    %c0_i32_0 = arith.constant 0 : i32
    return %arg0, %c0_i32 : i32, i32
  }
}

</mosaic_0001>

<llo_original>
// kernel: tpu_custom_call.1
$region0: #{tpu_custom_call.1}
  #allocation0 [shape = 'u32[]', space=smem, size = 0x4, offset = 0x4, fixed_abs, tag = 'smem constant byte address 0x4 - core index']
  #allocation1 [shape = 'u32[72,128]{1,0:T(1,128)}', space=vmem, size = 0x9000, scoped, tag = 'internal scratch']
  %s0 = inlined_call_operand.vmem [shape: f32[2,28,28], index: 0, kind: input, shape index: {}]
  %s1 = inlined_call_operand.vmem [shape: bf16[3,28,224], index: 1, kind: input, shape index: {}]
  %s2 = inlined_call_operand.hbm [shape: bf16[3,224,112], index: 2, kind: input, shape index: {}]
  %s3 = inlined_call_operand.vmem [shape: bf16[3,112,40], index: 3, kind: input, shape index: {}]
  %s4 = inlined_call_operand.vmem [shape: f32[1,224], index: 4, kind: input, shape index: {}]
  %s5 = inlined_call_operand.vmem [shape: f32[1,112], index: 5, kind: input, shape index: {}]
  %s6 = inlined_call_operand.vmem [shape: f32[1,40], index: 6, kind: input, shape index: {}]
  %s7 = inlined_call_operand.vmem [shape: f32[40,10], index: 7, kind: input, shape index: {}]
  %s8 = inlined_call_operand.hbm [shape: f32[2,10], index: 8, kind: output, shape index: {}]
  %s9 = sld [smem:[#allocation0]]
  $region46: #{tpu_custom_call.1} parent=0
    _
  %s11 = ssub.s32 1, %s9
  %s12 = scalar_select 0, %s11, %s9
  $region1: #{tpu_custom_call.1} parent=0
    #allocation2 [shape = 'u8[172032]{0}', space=vmem, size = 0x2a000, scoped, tag = 'input window, operand 2, single buffered']
    #allocation3 [shape = 's32[1]{0}', space=sflag, size = 0x4, scoped, tag = 'scoped memory for tpu_custom_call.1']
    #allocation4 [shape = 's32[1]{0}', space=sflag, size = 0x4, scoped, tag = 'scoped memory for tpu_custom_call.1']
    #allocation5 [shape = 'u8[1024]{0}', space=vmem, size = 0x400, scoped, tag = 'output window, operand 0, single buffered']
    %13 = vsyncpa [#allocation3], 0
    %14 = vsyncpa [#allocation4], 0
    // Predicated region
    $region2: #{tpu_custom_call.1} parent=1 // pred_check
      _
    $region3: #{tpu_custom_call.1} parent=1 // pred_check_branch
      %16 = sbr.rel (0) target = $region5
    $region4: #{tpu_custom_call.1} parent=1 // pred_region
      _
    $region5: #{tpu_custom_call.1} parent=1 // pred_fallthru
      _
    // Predicated region
    $region6: #{tpu_custom_call.1} parent=1 // pred_check
      _
    $region7: #{tpu_custom_call.1} parent=1 // pred_check_branch
      %18 = sbr.rel (0) target = $region9
    $region8: #{tpu_custom_call.1} parent=1 // pred_region
      _
    $region9: #{tpu_custom_call.1} parent=1 // pred_fallthru
      _
    // Predicated region
    $region10: #{tpu_custom_call.1} parent=1 // pred_check
      _
    $region11: #{tpu_custom_call.1} parent=1 // pred_check_branch
      %20 = sbr.rel (0) target = $region13
    $region12: #{tpu_custom_call.1} parent=1 // pred_region
      %22 = vsyncadd [#allocation3], 0
      %s23 = sshll.u32 %s2, 4
      %s24 = int_to_ptr.hbm [resolvable:$true] %s23
      %s25 = sshll.u32 [#allocation2], 4
      %s26 = int_to_ptr.vmem [resolvable:$true] %s25
      %31 = dma.hbm_to_vmem [thread:$0]  %s24, 5376, %s26, [#allocation3], 64, 64, 4
    $region13: #{tpu_custom_call.1} parent=1 // pred_fallthru
      _
    // Predicated region
    $region14: #{tpu_custom_call.1} parent=1 // pred_check
      _
    $region15: #{tpu_custom_call.1} parent=1 // pred_check_branch
      %33 = sbr.rel (0) target = $region17
    $region16: #{tpu_custom_call.1} parent=1 // pred_region
      _
    $region17: #{tpu_custom_call.1} parent=1 // pred_fallthru
      _
    // Predicated region
    $region18: #{tpu_custom_call.1} parent=1 // pred_check
      _
    $region19: #{tpu_custom_call.1} parent=1 // pred_check_branch
      %35 = sbr.rel (0) target = $region21
    $region20: #{tpu_custom_call.1} parent=1 // pred_region
      _
    $region21: #{tpu_custom_call.1} parent=1 // pred_fallthru
      _
    // Predicated region
    $region22: #{tpu_custom_call.1} parent=1 // pred_check
      _
    $region23: #{tpu_custom_call.1} parent=1 // pred_check_branch
      %37 = sbr.rel (0) target = $region25
    $region24: #{tpu_custom_call.1} parent=1 // pred_region
      _
    $region25: #{tpu_custom_call.1} parent=1 // pred_fallthru
      _
    // Predicated region
    $region26: #{tpu_custom_call.1} parent=1 // pred_check
      _
    $region27: #{tpu_custom_call.1} parent=1 // pred_check_branch
      %39 = sbr.rel (0) target = $region29
    $region28: #{tpu_custom_call.1} parent=1 // pred_region
      _
    $region29: #{tpu_custom_call.1} parent=1 // pred_fallthru
      _
    // Predicated region
    $region30: #{tpu_custom_call.1} parent=1 // pred_check
      _
    $region31: #{tpu_custom_call.1} parent=1 // pred_check_branch
      %41 = sbr.rel (0) target = $region33
    $region32: #{tpu_custom_call.1} parent=1 // pred_region
      _
    $region33: #{tpu_custom_call.1} parent=1 // pred_fallthru
      _
    // Predicated region
    $region34: #{tpu_custom_call.1} parent=1 // pred_check
      _
    $region35: #{tpu_custom_call.1} parent=1 // pred_check_branch
      %43 = sbr.rel (0) target = $region37
    $region36: #{tpu_custom_call.1} parent=1 // pred_region
      %45 = dma.done [#allocation3], 5376
    $region37: #{tpu_custom_call.1} parent=1 // pred_fallthru
      _
    %v47 = vld [vmem:[%s0] sm:$0xff]
    %v48 = vld [vmem:[%s0 + $0x8] sm:$0xff]
    %v49 = vld [vmem:[%s0 + $0x10] sm:$0xff]
    %v50 = vld [vmem:[%s0 + $0x18] sm:$0xf]
    %v51 = vld [vmem:[%s0 + $0x20] sm:$0xff]
    %v52 = vld [vmem:[%s0 + $0x28] sm:$0xff]
    %v53 = vld [vmem:[%s0 + $0x30] sm:$0xff]
    %v54 = vld [vmem:[%s0 + $0x38] sm:$0xf]
    %vm63 = vcmask 1040384
    %v64 = vrot.slane %v47, 7
    %v65 = vrot.slane %v48, 7
    %v66 = vsel %vm63, %v64, %v65
    %v67 = vrot.slane %v49, 7
    %v68 = vsel %vm63, %v65, %v67
    %v69 = vrot.slane %v50, 7
    %v70 = vsel %vm63, %v67, %v69
    %v71 = vrot.slane %v51, 7
    %v72 = vrot.slane %v52, 7
    %v73 = vsel %vm63, %v71, %v72
    %v74 = vrot.slane %v53, 7
    %v75 = vsel %vm63, %v72, %v74
    %v76 = vrot.slane %v54, 7
    %v77 = vsel %vm63, %v74, %v76
    %v86 = vsel %vm63, 0.0, %v64
    %v87 = vsel %vm63, 0.0, %v71
    %vm88 = vcmask 1044480
    %v89 = vsel %vm88, %v70, 0.0
    %v90 = vsel %vm88, %v77, 0.0
    %v95 = vrot.slane %v86, 2
    %v96 = vrot.slane %v86, 4
    %v97 = vrot.slane %v86, 6
    %v98 = vrot.slane %v66, 2
    %v99 = vrot.slane %v66, 4
    %v100 = vrot.slane %v66, 6
    %v101 = vrot.slane %v68, 2
    %v102 = vrot.slane %v68, 4
    %v103 = vrot.slane %v68, 6
    %v104 = vrot.slane %v89, 2
    %v105 = vrot.slane %v89, 4
    %v106 = vrot.slane %v87, 2
    %v107 = vrot.slane %v87, 4
    %v108 = vrot.slane %v87, 6
    %v109 = vrot.slane %v73, 2
    %v110 = vrot.slane %v73, 4
    %v111 = vrot.slane %v73, 6
    %v112 = vrot.slane %v75, 2
    %v113 = vrot.slane %v75, 4
    %v114 = vrot.slane %v75, 6
    %v115 = vrot.slane %v90, 2
    %v116 = vrot.slane %v90, 4
    %v139 = vpack.c.bf16 %v86, %v86
    %v140 = vpack.c.bf16 %v95, %v95
    %v141 = vpack.c.bf16 %v96, %v96
    %v142 = vpack.c.bf16 %v97, %v97
    %v143 = vpack.c.bf16 %v66, %v66
    %v144 = vpack.c.bf16 %v98, %v98
    %v145 = vpack.c.bf16 %v99, %v99
    %v146 = vpack.c.bf16 %v100, %v100
    %v147 = vpack.c.bf16 %v68, %v68
    %v148 = vpack.c.bf16 %v101, %v101
    %v149 = vpack.c.bf16 %v102, %v102
    %v150 = vpack.c.bf16 %v103, %v103
    %v151 = vpack.c.bf16 %v89, %v89
    %v152 = vpack.c.bf16 %v104, %v104
    %v153 = vpack.c.bf16 %v87, %v87
    %v154 = vpack.c.bf16 %v106, %v106
    %v155 = vpack.c.bf16 %v107, %v107
    %v156 = vpack.c.bf16 %v108, %v108
    %v157 = vpack.c.bf16 %v73, %v73
    %v158 = vpack.c.bf16 %v109, %v109
    %v159 = vpack.c.bf16 %v110, %v110
    %v160 = vpack.c.bf16 %v111, %v111
    %v161 = vpack.c.bf16 %v75, %v75
    %v162 = vpack.c.bf16 %v112, %v112
    %v163 = vpack.c.bf16 %v113, %v113
    %v164 = vpack.c.bf16 %v114, %v114
    %v165 = vpack.c.bf16 %v90, %v90
    %v166 = vpack.c.bf16 %v115, %v115
    %v167 = vld [vmem:[%s1] sm:$0xff]
    %v168 = vld [vmem:[%s1 + $0x8] sm:$0xff]
    %v169 = vld [vmem:[%s1 + $0x10] sm:$0xff]
    %v170 = vld [vmem:[%s1 + $0x18] sm:$0x33]
    %s171 = scalar_lea.vmem %s1, 32
    %v172 = vld [vmem:[%s171] sm:$0xff]
    %v173 = vld [vmem:[%s171 + $0x8] sm:$0xff]
    %v174 = vld [vmem:[%s171 + $0x10] sm:$0xff]
    %v175 = vld [vmem:[%s171 + $0x18] sm:$0x33]
    %v204 = vunpack.c.l.b16 %v139
    %v205 = vunpack.c.l.b16 %v140
    %v206 = vunpack.c.l.b16 %v141
    %v207 = vunpack.c.l.b16 %v142
    %v208 = vunpack.c.l.b16 %v143
    %v209 = vunpack.c.l.b16 %v144
    %v210 = vunpack.c.l.b16 %v145
    %v211 = vunpack.c.l.b16 %v146
    %v212 = vunpack.c.l.b16 %v147
    %v213 = vunpack.c.l.b16 %v148
    %v214 = vunpack.c.l.b16 %v149
    %v215 = vunpack.c.l.b16 %v150
    %v216 = vunpack.c.l.b16 %v151
    %v217 = vunpack.c.l.b16 %v152
    %v218 = vunpack.c.l.b16 %v153
    %v219 = vunpack.c.l.b16 %v154
    %v220 = vunpack.c.l.b16 %v155
    %v221 = vunpack.c.l.b16 %v156
    %v222 = vunpack.c.l.b16 %v157
    %v223 = vunpack.c.l.b16 %v158
    %v224 = vunpack.c.l.b16 %v159
    %v225 = vunpack.c.l.b16 %v160
    %v226 = vunpack.c.l.b16 %v161
    %v227 = vunpack.c.l.b16 %v162
    %v228 = vunpack.c.l.b16 %v163
    %v229 = vunpack.c.l.b16 %v164
    %v230 = vunpack.c.l.b16 %v165
    %v231 = vunpack.c.l.b16 %v166
    %v232 = vrot.slane %v204, 1
    %vm233 = vcmask 1041409
    %v234 = vsel %vm233, %v205, %v232
    %v235 = vrot.slane %v206, 7
    %vm236 = vcmask 1042434
    %v237 = vsel %vm236, %v235, %v234
    %v238 = vrot.slane %v207, 6
    %vm239 = vcmask 1043459
    %v240 = vsel %vm239, %v238, %v237
    %v241 = vrot.slane %v208, 5
    %vm242 = vcmask 1044484
    %v243 = vsel %vm242, %v241, %v240
    %v244 = vrot.slane %v209, 4
    %vm245 = vcmask 1045509
    %v246 = vsel %vm245, %v244, %v243
    %v247 = vrot.slane %v210, 3
    %vm248 = vcmask 1046534
    %v249 = vsel %vm248, %v247, %v246
    %v250 = vrot.slane %v211, 2
    %vm251 = vcmask 1047559
    %v252 = vsel %vm251, %v250, %v249
    %v253 = vrot.slane %v212, 1
    %v254 = vsel %vm233, %v213, %v253
    %v255 = vrot.slane %v214, 7
    %v256 = vsel %vm236, %v255, %v254
    %v257 = vrot.slane %v215, 6
    %v258 = vsel %vm239, %v257, %v256
    %v259 = vrot.slane %v216, 5
    %v260 = vsel %vm242, %v259, %v258
    %v261 = vrot.slane %v217, 4
    %v262 = vsel %vm245, %v261, %v260
    %v263 = vrot.slane %v218, 3
    %v264 = vsel %vm248, %v263, %v262
    %v265 = vrot.slane %v219, 2
    %v266 = vsel %vm251, %v265, %v264
    %v267 = vrot.slane %v220, 1
    %v268 = vsel %vm233, %v221, %v267
    %v269 = vrot.slane %v222, 7
    %v270 = vsel %vm236, %v269, %v268
    %v271 = vrot.slane %v223, 6
    %v272 = vsel %vm239, %v271, %v270
    %v273 = vrot.slane %v224, 5
    %v274 = vsel %vm242, %v273, %v272
    %v275 = vrot.slane %v225, 4
    %v276 = vsel %vm245, %v275, %v274
    %v277 = vrot.slane %v226, 3
    %v278 = vsel %vm248, %v277, %v276
    %v279 = vrot.slane %v227, 2
    %v280 = vsel %vm251, %v279, %v278
    %v281 = vrot.slane %v228, 1
    %v282 = vsel %vm233, %v229, %v281
    %v283 = vrot.slane %v230, 7
    %v284 = vsel %vm236, %v283, %v282
    %v285 = vrot.slane %v231, 6
    %v286 = vsel %vm239, %v285, %v284
    %v287 = vpack.c.b16 %v266, %v252
    %v288 = vpack.c.b16 %v286, %v280
    %v293 = vunpack.c.l.b16 %v172
    %v294 = vunpack.c.h.b16 %v172
    %v295 = vunpack.c.l.b16 %v173
    %v296 = vunpack.c.h.b16 %v173
    %v297 = vunpack.c.l.b16 %v174
    %v298 = vunpack.c.h.b16 %v174
    %v299 = vunpack.c.l.b16 %v175
    %v300 = vunpack.c.h.b16 %v175
    %v301 = vpack.c.b16 %v295, %v293
    %v302 = vpack.c.b16 %v296, %v294
    %v303 = vpack.c.b16 %v299, %v297
    %v304 = vpack.c.b16 %v300, %v298
    %vm307 = vcmask 228352
    %v309 = vsel %vm307, %v287, 0
    %v312 = vsel %vm307, %v288, 0
    %vm314 = vcmask 1045504
    %v316 = vsel %vm314, %v303, 0
    %v319 = vsel %vm314, %v304, 0
    %321 = vmatpush.bf16.msra.mxu0 0
    %322 = vmatpush.bf16.msra.mxu0 0
    %323 = vmatpush.bf16.msra.mxu0 0
    %324 = vmatpush.bf16.msra.mxu0 0
    %325 = vmatpush.bf16.msra.mxu0 0
    %326 = vmatpush.bf16.msra.mxu0 0
    %327 = vmatpush.bf16.msra.mxu0 %v316
    %328 = vmatpush.bf16.msra.mxu0 %v301
    %329 = vmatmul.bf16.gmra.mxu0 %v309
    %v330 = vpop.f32.mrf.mxu0
    %v331 = vadd.f32 0.0, %v330
    %v332 = vpop.f32.mrf.mxu0
    %v333 = vadd.f32 0.0, %v332
    %334 = vmatmul.bf16.gmra.mxu0 %v312
    %v335 = vpop.f32.mrf.mxu0
    %v336 = vadd.f32 0.0, %v335
    %v337 = vpop.f32.mrf.mxu0
    %v338 = vadd.f32 0.0, %v337
    %339 = vdwg.mxu0
    %340 = vmatpush.bf16.msra.mxu0 0
    %341 = vmatpush.bf16.msra.mxu0 0
    %342 = vmatpush.bf16.msra.mxu0 0
    %343 = vmatpush.bf16.msra.mxu0 0
    %344 = vmatpush.bf16.msra.mxu0 0
    %345 = vmatpush.bf16.msra.mxu0 0
    %346 = vmatpush.bf16.msra.mxu0 %v319
    %347 = vmatpush.bf16.msra.mxu0 %v302
    %348 = vmatmul.bf16.gmra.mxu0 %v309
    %v349 = vpop.f32.mrf.mxu0
    %v350 = vadd.f32 0.0, %v349
    %v351 = vpop.f32.mrf.mxu0
    %v352 = vadd.f32 0.0, %v351
    %353 = vmatmul.bf16.gmra.mxu0 %v312
    %v354 = vpop.f32.mrf.mxu0
    %v355 = vadd.f32 0.0, %v354
    %v356 = vpop.f32.mrf.mxu0
    %v357 = vadd.f32 0.0, %v356
    %358 = vdwg.mxu0
    %v359 = vrot.slane %v205, 7
    %v360 = vsel %vm233, %v359, %v204
    %v361 = vrot.slane %v206, 6
    %v362 = vsel %vm236, %v361, %v360
    %v363 = vrot.slane %v207, 5
    %v364 = vsel %vm239, %v363, %v362
    %v365 = vrot.slane %v208, 4
    %v366 = vsel %vm242, %v365, %v364
    %v367 = vrot.slane %v209, 3
    %v368 = vsel %vm245, %v367, %v366
    %v369 = vrot.slane %v210, 2
    %v370 = vsel %vm248, %v369, %v368
    %v371 = vrot.slane %v211, 1
    %v372 = vsel %vm251, %v371, %v370
    %v373 = vrot.slane %v213, 7
    %v374 = vsel %vm233, %v373, %v212
    %v375 = vrot.slane %v214, 6
    %v376 = vsel %vm236, %v375, %v374
    %v377 = vrot.slane %v215, 5
    %v378 = vsel %vm239, %v377, %v376
    %v379 = vrot.slane %v216, 4
    %v380 = vsel %vm242, %v379, %v378
    %v381 = vrot.slane %v217, 3
    %v382 = vsel %vm245, %v381, %v380
    %v383 = vrot.slane %v218, 2
    %v384 = vsel %vm248, %v383, %v382
    %v385 = vrot.slane %v219, 1
    %v386 = vsel %vm251, %v385, %v384
    %v387 = vrot.slane %v221, 7
    %v388 = vsel %vm233, %v387, %v220
    %v389 = vrot.slane %v222, 6
    %v390 = vsel %vm236, %v389, %v388
    %v391 = vrot.slane %v223, 5
    %v392 = vsel %vm239, %v391, %v390
    %v393 = vrot.slane %v224, 4
    %v394 = vsel %vm242, %v393, %v392
    %v395 = vrot.slane %v225, 3
    %v396 = vsel %vm245, %v395, %v394
    %v397 = vrot.slane %v226, 2
    %v398 = vsel %vm248, %v397, %v396
    %v399 = vrot.slane %v227, 1
    %v400 = vsel %vm251, %v399, %v398
    %v401 = vrot.slane %v229, 7
    %v402 = vsel %vm233, %v401, %v228
    %v403 = vrot.slane %v230, 6
    %v404 = vsel %vm236, %v403, %v402
    %v405 = vrot.slane %v231, 5
    %v406 = vsel %vm239, %v405, %v404
    %v407 = vpack.c.b16 %v386, %v372
    %v408 = vpack.c.b16 %v406, %v400
    %v413 = vunpack.c.l.b16 %v167
    %v414 = vunpack.c.h.b16 %v167
    %v415 = vunpack.c.l.b16 %v168
    %v416 = vunpack.c.h.b16 %v168
    %v417 = vunpack.c.l.b16 %v169
    %v418 = vunpack.c.h.b16 %v169
    %v419 = vunpack.c.l.b16 %v170
    %v420 = vunpack.c.h.b16 %v170
    %v421 = vpack.c.b16 %v415, %v413
    %v422 = vpack.c.b16 %v416, %v414
    %v423 = vpack.c.b16 %v419, %v417
    %v424 = vpack.c.b16 %v420, %v418
    %v428 = vsel %vm307, %v407, 0
    %v431 = vsel %vm307, %v408, 0
    %v434 = vsel %vm314, %v423, 0
    %v437 = vsel %vm314, %v424, 0
    %439 = vmatpush.bf16.msra.mxu0 0
    %440 = vmatpush.bf16.msra.mxu0 0
    %441 = vmatpush.bf16.msra.mxu0 0
    %442 = vmatpush.bf16.msra.mxu0 0
    %443 = vmatpush.bf16.msra.mxu0 0
    %444 = vmatpush.bf16.msra.mxu0 0
    %445 = vmatpush.bf16.msra.mxu0 %v434
    %446 = vmatpush.bf16.msra.mxu0 %v421
    %447 = vmatmul.bf16.gmra.mxu0 %v428
    %v448 = vpop.f32.mrf.mxu0
    %v449 = vadd.f32 %v331, %v448
    %v450 = vpop.f32.mrf.mxu0
    %v451 = vadd.f32 %v333, %v450
    %452 = vmatmul.bf16.gmra.mxu0 %v431
    %v453 = vpop.f32.mrf.mxu0
    %v454 = vadd.f32 %v336, %v453
    %v455 = vpop.f32.mrf.mxu0
    %v456 = vadd.f32 %v338, %v455
    %457 = vdwg.mxu0
    %458 = vmatpush.bf16.msra.mxu0 0
    %459 = vmatpush.bf16.msra.mxu0 0
    %460 = vmatpush.bf16.msra.mxu0 0
    %461 = vmatpush.bf16.msra.mxu0 0
    %462 = vmatpush.bf16.msra.mxu0 0
    %463 = vmatpush.bf16.msra.mxu0 0
    %464 = vmatpush.bf16.msra.mxu0 %v437
    %465 = vmatpush.bf16.msra.mxu0 %v422
    %466 = vmatmul.bf16.gmra.mxu0 %v428
    %v467 = vpop.f32.mrf.mxu0
    %v468 = vadd.f32 %v350, %v467
    %v469 = vpop.f32.mrf.mxu0
    %v470 = vadd.f32 %v352, %v469
    %471 = vmatmul.bf16.gmra.mxu0 %v431
    %v472 = vpop.f32.mrf.mxu0
    %v473 = vadd.f32 %v355, %v472
    %v474 = vpop.f32.mrf.mxu0
    %v475 = vadd.f32 %v357, %v474
    %476 = vdwg.mxu0
    %v477 = vpack.c.bf16 %v105, %v105
    %v478 = vpack.c.bf16 %v116, %v116
    %s479 = scalar_lea.vmem %s1, 64
    %v480 = vld [vmem:[%s479] sm:$0xff]
    %v481 = vld [vmem:[%s479 + $0x8] sm:$0xff]
    %v482 = vld [vmem:[%s479 + $0x10] sm:$0xff]
    %v483 = vld [vmem:[%s479 + $0x18] sm:$0x33]
    %v486 = vunpack.c.l.b16 %v477
    %v487 = vunpack.c.l.b16 %v478
    %v488 = vsel %vm233, %v235, %v205
    %v489 = vsel %vm236, %v238, %v488
    %v490 = vsel %vm239, %v241, %v489
    %v491 = vsel %vm242, %v244, %v490
    %v492 = vsel %vm245, %v247, %v491
    %v493 = vsel %vm248, %v250, %v492
    %v494 = vsel %vm251, %v253, %v493
    %v495 = vsel %vm233, %v255, %v213
    %v496 = vsel %vm236, %v257, %v495
    %v497 = vsel %vm239, %v259, %v496
    %v498 = vsel %vm242, %v261, %v497
    %v499 = vrot.slane %v486, 3
    %v500 = vsel %vm245, %v499, %v498
    %v501 = vsel %vm248, %v265, %v500
    %v502 = vsel %vm251, %v267, %v501
    %v503 = vsel %vm233, %v269, %v221
    %v504 = vsel %vm236, %v271, %v503
    %v505 = vsel %vm239, %v273, %v504
    %v506 = vsel %vm242, %v275, %v505
    %v507 = vsel %vm245, %v277, %v506
    %v508 = vsel %vm248, %v279, %v507
    %v509 = vsel %vm251, %v281, %v508
    %v510 = vsel %vm233, %v283, %v229
    %v511 = vsel %vm236, %v285, %v510
    %v512 = vrot.slane %v487, 5
    %v513 = vsel %vm239, %v512, %v511
    %v514 = vpack.c.b16 %v502, %v494
    %v515 = vpack.c.b16 %v513, %v509
    %v520 = vunpack.c.l.b16 %v480
    %v521 = vunpack.c.h.b16 %v480
    %v522 = vunpack.c.l.b16 %v481
    %v523 = vunpack.c.h.b16 %v481
    %v524 = vunpack.c.l.b16 %v482
    %v525 = vunpack.c.h.b16 %v482
    %v526 = vunpack.c.l.b16 %v483
    %v527 = vunpack.c.h.b16 %v483
    %v528 = vpack.c.b16 %v522, %v520
    %v529 = vpack.c.b16 %v523, %v521
    %v530 = vpack.c.b16 %v526, %v524
    %v531 = vpack.c.b16 %v527, %v525
    %v535 = vsel %vm307, %v514, 0
    %v538 = vsel %vm307, %v515, 0
    %v541 = vsel %vm314, %v530, 0
    %v544 = vsel %vm314, %v531, 0
    %546 = vmatpush.bf16.msra.mxu0 0
    %547 = vmatpush.bf16.msra.mxu0 0
    %548 = vmatpush.bf16.msra.mxu0 0
    %549 = vmatpush.bf16.msra.mxu0 0
    %550 = vmatpush.bf16.msra.mxu0 0
    %551 = vmatpush.bf16.msra.mxu0 0
    %552 = vmatpush.bf16.msra.mxu0 %v541
    %553 = vmatpush.bf16.msra.mxu0 %v528
    %554 = vmatmul.bf16.gmra.mxu0 %v535
    %v555 = vpop.f32.mrf.mxu0
    %v556 = vadd.f32 0.0, %v555
    %v557 = vpop.f32.mrf.mxu0
    %v558 = vadd.f32 0.0, %v557
    %559 = vmatmul.bf16.gmra.mxu0 %v538
    %v560 = vpop.f32.mrf.mxu0
    %v561 = vadd.f32 0.0, %v560
    %v562 = vpop.f32.mrf.mxu0
    %v563 = vadd.f32 0.0, %v562
    %564 = vdwg.mxu0
    %565 = vmatpush.bf16.msra.mxu0 0
    %566 = vmatpush.bf16.msra.mxu0 0
    %567 = vmatpush.bf16.msra.mxu0 0
    %568 = vmatpush.bf16.msra.mxu0 0
    %569 = vmatpush.bf16.msra.mxu0 0
    %570 = vmatpush.bf16.msra.mxu0 0
    %571 = vmatpush.bf16.msra.mxu0 %v544
    %572 = vmatpush.bf16.msra.mxu0 %v529
    %573 = vmatmul.bf16.gmra.mxu0 %v535
    %v574 = vpop.f32.mrf.mxu0
    %v575 = vadd.f32 0.0, %v574
    %v576 = vpop.f32.mrf.mxu0
    %v577 = vadd.f32 0.0, %v576
    %578 = vmatmul.bf16.gmra.mxu0 %v538
    %v579 = vpop.f32.mrf.mxu0
    %v580 = vadd.f32 0.0, %v579
    %v581 = vpop.f32.mrf.mxu0
    %v582 = vadd.f32 0.0, %v581
    %583 = vdwg.mxu0
    %v584 = vadd.f32 %v449, %v556
    %v585 = vadd.f32 %v468, %v575
    %v586 = vadd.f32 %v451, %v558
    %v587 = vadd.f32 %v470, %v577
    %v588 = vadd.f32 %v454, %v561
    %v589 = vadd.f32 %v473, %v580
    %v590 = vadd.f32 %v456, %v563
    %v591 = vadd.f32 %v475, %v582
    %v592 = vld [vmem:[%s4] sm:$0x3]
    %v594 = vperm.slane %v592, 0
    %v595 = vperm.slane %v592, 1
    %v598 = vadd.f32 %v584, %v594
    %v599 = vadd.f32 %v585, %v595
    %v600 = vadd.f32 %v586, %v594
    %v601 = vadd.f32 %v587, %v595
    %v602 = vadd.f32 %v588, %v594
    %v603 = vadd.f32 %v589, %v595
    %v604 = vadd.f32 %v590, %v594
    %v605 = vadd.f32 %v591, %v595
    %v606 = vmax.f32 %v598, 0.0
    %v607 = vmax.f32 %v599, 0.0
    %v608 = vmax.f32 %v600, 0.0
    %v609 = vmax.f32 %v601, 0.0
    %v610 = vmax.f32 %v602, 0.0
    %v611 = vmax.f32 %v603, 0.0
    %v612 = vmax.f32 %v604, 0.0
    %v613 = vmax.f32 %v605, 0.0
    %v622 = vrot.slane %v607, 6
    %v623 = vrot.slane %v609, 6
    %v624 = vrot.slane %v611, 6
    %v625 = vrot.slane %v613, 6
    %vm626 = vcmask 1041408
    %v627 = vsel %vm626, %v606, %v622
    %vm628 = vcmask 1043458
    %v629 = vsel %vm628, %v606, %v622
    %v630 = vrot.slane %v629, 2
    %vm631 = vcmask 1045508
    %v632 = vsel %vm631, %v606, %v622
    %v633 = vrot.slane %v632, 4
    %v634 = vsel %vm314, %v622, %v606
    %v635 = vrot.slane %v634, 6
    %v636 = vsel %vm626, %v608, %v623
    %v637 = vsel %vm628, %v608, %v623
    %v638 = vrot.slane %v637, 2
    %v639 = vsel %vm631, %v608, %v623
    %v640 = vrot.slane %v639, 4
    %v641 = vsel %vm314, %v623, %v608
    %v642 = vrot.slane %v641, 6
    %v643 = vsel %vm626, %v610, %v624
    %v644 = vsel %vm628, %v610, %v624
    %v645 = vrot.slane %v644, 2
    %v646 = vsel %vm631, %v610, %v624
    %v647 = vrot.slane %v646, 4
    %v648 = vsel %vm314, %v624, %v610
    %v649 = vrot.slane %v648, 6
    %v650 = vsel %vm626, %v612, %v625
    %v651 = vsel %vm628, %v612, %v625
    %v652 = vrot.slane %v651, 2
    %653 = vst [vmem:[#allocation1] ss:$4 sm:$0xff] %v627
    %s654 = scalar_lea.vmem [#allocation1], 1
    %655 = vst [vmem:[%s654] ss:$4 sm:$0xff] %v630
    %s656 = scalar_lea.vmem [#allocation1], 2
    %657 = vst [vmem:[%s656] ss:$4 sm:$0xff] %v633
    %s658 = scalar_lea.vmem [#allocation1], 3
    %659 = vst [vmem:[%s658] ss:$4 sm:$0xff] %v635
    %s660 = scalar_lea.vmem [#allocation1], 32
    %661 = vst [vmem:[%s660] ss:$4 sm:$0xff] %v636
    %s662 = scalar_lea.vmem [#allocation1], 33
    %663 = vst [vmem:[%s662] ss:$4 sm:$0xff] %v638
    %s664 = scalar_lea.vmem [#allocation1], 34
    %665 = vst [vmem:[%s664] ss:$4 sm:$0xff] %v640
    %v666 = vld.sshfl [vmem:[#allocation1] sm:$0xff pattern:$0x73625140]
    %v667 = vld.sshfl [vmem:[#allocation1 + $0x8] sm:$0xff pattern:$0x73625140]
    %v668 = vld.sshfl [vmem:[#allocation1 + $0x20] sm:$0xff pattern:$0x73625140]
    %v669 = vld.sshfl [vmem:[#allocation1 + $0x28] sm:$0xff pattern:$0x73625140]
    %670 = vst [vmem:[#allocation1] ss:$4 sm:$0xff] %v642
    %671 = vst [vmem:[%s654] ss:$4 sm:$0xff] %v643
    %672 = vst [vmem:[%s656] ss:$4 sm:$0xff] %v645
    %673 = vst [vmem:[%s658] ss:$4 sm:$0xff] %v647
    %674 = vst [vmem:[%s660] ss:$4 sm:$0xff] %v649
    %675 = vst [vmem:[%s662] ss:$4 sm:$0xff] %v650
    %676 = vst [vmem:[%s664] ss:$4 sm:$0xff] %v652
    %v677 = vld.sshfl [vmem:[#allocation1] sm:$0xff pattern:$0x73625140]
    %v678 = vld.sshfl [vmem:[#allocation1 + $0x8] sm:$0xff pattern:$0x73625140]
    %v679 = vld.sshfl [vmem:[#allocation1 + $0x20] sm:$0xff pattern:$0x73625140]
    %v680 = vld.sshfl [vmem:[#allocation1 + $0x28] sm:$0xff pattern:$0x73625140]
    %v681 = vrot.slane %v666, 7
    %v682 = vrot.slane %v667, 7
    %v683 = vrot.slane %v668, 7
    %v684 = vsel %vm63, %v681, %v683
    %v685 = vrot.slane %v669, 7
    %v686 = vsel %vm63, %v682, %v685
    %v687 = vrot.slane %v677, 7
    %v688 = vrot.slane %v678, 7
    %v689 = vrot.slane %v679, 7
    %v690 = vsel %vm63, %v687, %v689
    %v691 = vrot.slane %v680, 7
    %v692 = vsel %vm63, %v688, %v691
    %v701 = vsel %vm63, 0.0, %v681
    %v702 = vsel %vm63, 0.0, %v682
    %v703 = vsel %vm63, 0.0, %v687
    %v704 = vsel %vm63, 0.0, %v688
    %vm705 = vcmask 1046528
    %v706 = vsel %vm705, %v684, 0.0
    %v707 = vsel %vm705, %v686, 0.0
    %v708 = vsel %vm705, %v690, 0.0
    %v709 = vsel %vm705, %v692, 0.0
    %v718 = vrot.slane %v702, 6
    %v719 = vrot.slane %v707, 6
    %v720 = vrot.slane %v704, 6
    %v721 = vrot.slane %v709, 6
    %v722 = vsel %vm626, %v701, %v718
    %v723 = vsel %vm628, %v701, %v718
    %v724 = vrot.slane %v723, 2
    %v725 = vsel %vm631, %v701, %v718
    %v726 = vrot.slane %v725, 4
    %v727 = vsel %vm314, %v718, %v701
    %v728 = vrot.slane %v727, 6
    %v729 = vsel %vm626, %v706, %v719
    %v730 = vsel %vm628, %v706, %v719
    %v731 = vrot.slane %v730, 2
    %v732 = vsel %vm631, %v706, %v719
    %v733 = vrot.slane %v732, 4
    %v734 = vsel %vm314, %v719, %v706
    %v735 = vrot.slane %v734, 6
    %v736 = vsel %vm626, %v703, %v720
    %v737 = vsel %vm628, %v703, %v720
    %v738 = vrot.slane %v737, 2
    %v739 = vsel %vm631, %v703, %v720
    %v740 = vrot.slane %v739, 4
    %v741 = vsel %vm314, %v720, %v703
    %v742 = vrot.slane %v741, 6
    %v743 = vsel %vm626, %v708, %v721
    %v744 = vsel %vm628, %v708, %v721
    %v745 = vrot.slane %v744, 2
    %v746 = vsel %vm631, %v708, %v721
    %v747 = vrot.slane %v746, 4
    %v748 = vsel %vm314, %v721, %v708
    %v749 = vrot.slane %v748, 6
    %v750 = vperm.slane %v722, 0
    %v751 = vperm.slane %v722, 2
    %v752 = vperm.slane %v724, 0
    %v753 = vperm.slane %v724, 2
    %v754 = vperm.slane %v726, 0
    %v755 = vperm.slane %v726, 2
    %v756 = vperm.slane %v728, 0
    %v757 = vperm.slane %v728, 2
    %v758 = vperm.slane %v729, 0
    %v759 = vperm.slane %v729, 2
    %v760 = vperm.slane %v731, 0
    %v761 = vperm.slane %v731, 2
    %v762 = vperm.slane %v733, 0
    %v763 = vperm.slane %v733, 2
    %v764 = vperm.slane %v736, 0
    %v765 = vperm.slane %v736, 2
    %v766 = vperm.slane %v738, 0
    %v767 = vperm.slane %v738, 2
    %v768 = vperm.slane %v740, 0
    %v769 = vperm.slane %v740, 2
    %v770 = vperm.slane %v742, 0
    %v771 = vperm.slane %v742, 2
    %v772 = vperm.slane %v743, 0
    %v773 = vperm.slane %v743, 2
    %v774 = vperm.slane %v745, 0
    %v775 = vperm.slane %v745, 2
    %v776 = vperm.slane %v747, 0
    %v777 = vperm.slane %v747, 2
    %v806 = vpack.c.bf16 %v750, %v750
    %v807 = vpack.c.bf16 %v751, %v751
    %v808 = vpack.c.bf16 %v752, %v752
    %v809 = vpack.c.bf16 %v753, %v753
    %v810 = vpack.c.bf16 %v754, %v754
    %v811 = vpack.c.bf16 %v755, %v755
    %v812 = vpack.c.bf16 %v756, %v756
    %v813 = vpack.c.bf16 %v757, %v757
    %v814 = vpack.c.bf16 %v758, %v758
    %v815 = vpack.c.bf16 %v759, %v759
    %v816 = vpack.c.bf16 %v760, %v760
    %v817 = vpack.c.bf16 %v761, %v761
    %v818 = vpack.c.bf16 %v762, %v762
    %v819 = vpack.c.bf16 %v763, %v763
    %v820 = vpack.c.bf16 %v764, %v764
    %v821 = vpack.c.bf16 %v765, %v765
    %v822 = vpack.c.bf16 %v766, %v766
    %v823 = vpack.c.bf16 %v767, %v767
    %v824 = vpack.c.bf16 %v768, %v768
    %v825 = vpack.c.bf16 %v769, %v769
    %v826 = vpack.c.bf16 %v770, %v770
    %v827 = vpack.c.bf16 %v771, %v771
    %v828 = vpack.c.bf16 %v772, %v772
    %v829 = vpack.c.bf16 %v773, %v773
    %v830 = vpack.c.bf16 %v774, %v774
    %v831 = vpack.c.bf16 %v775, %v775
    %v832 = vpack.c.bf16 %v776, %v776
    %v833 = vpack.c.bf16 %v777, %v777
    %v834 = vld [vmem:[#allocation2] sm:$0xf]
    %v835 = vld [vmem:[#allocation2 + $0x4] sm:$0xf]
    %v836 = vld [vmem:[#allocation2 + $0x8] sm:$0xf]
    %v837 = vld [vmem:[#allocation2 + $0xc] sm:$0xf]
    %v838 = vld [vmem:[#allocation2 + $0x10] sm:$0xf]
    %v839 = vld [vmem:[#allocation2 + $0x14] sm:$0xf]
    %v840 = vld [vmem:[#allocation2 + $0x18] sm:$0xf]
    %v841 = vld [vmem:[#allocation2 + $0x1c] sm:$0xf]
    %v842 = vld [vmem:[#allocation2 + $0x20] sm:$0xf]
    %v843 = vld [vmem:[#allocation2 + $0x24] sm:$0xf]
    %v844 = vld [vmem:[#allocation2 + $0x28] sm:$0xf]
    %v845 = vld [vmem:[#allocation2 + $0x2c] sm:$0xf]
    %v846 = vld [vmem:[#allocation2 + $0x30] sm:$0xf]
    %v847 = vld [vmem:[#allocation2 + $0x34] sm:$0xf]
    %v848 = vld [vmem:[#allocation2 + $0x38] sm:$0xf]
    %v849 = vld [vmem:[#allocation2 + $0x3c] sm:$0xf]
    %v850 = vld [vmem:[#allocation2 + $0x40] sm:$0xf]
    %v851 = vld [vmem:[#allocation2 + $0x44] sm:$0xf]
    %v852 = vld [vmem:[#allocation2 + $0x48] sm:$0xf]
    %v853 = vld [vmem:[#allocation2 + $0x4c] sm:$0xf]
    %v854 = vld [vmem:[#allocation2 + $0x50] sm:$0xf]
    %v855 = vld [vmem:[#allocation2 + $0x54] sm:$0xf]
    %v856 = vld [vmem:[#allocation2 + $0x58] sm:$0xf]
    %v857 = vld [vmem:[#allocation2 + $0x5c] sm:$0xf]
    %v858 = vld [vmem:[#allocation2 + $0x60] sm:$0xf]
    %v859 = vld [vmem:[#allocation2 + $0x64] sm:$0xf]
    %v860 = vld [vmem:[#allocation2 + $0x68] sm:$0xf]
    %v861 = vld [vmem:[#allocation2 + $0x6c] sm:$0xf]
    %v862 = vperm.slane %v722, 1
    %v863 = vperm.slane %v722, 3
    %v864 = vperm.slane %v724, 1
    %v865 = vperm.slane %v724, 3
    %v866 = vperm.slane %v726, 1
    %v867 = vperm.slane %v726, 3
    %v868 = vperm.slane %v728, 1
    %v869 = vperm.slane %v728, 3
    %v870 = vperm.slane %v729, 1
    %v871 = vperm.slane %v729, 3
    %v872 = vperm.slane %v731, 1
    %v873 = vperm.slane %v731, 3
    %v874 = vperm.slane %v733, 1
    %v875 = vperm.slane %v733, 3
    %v876 = vperm.slane %v736, 1
    %v877 = vperm.slane %v736, 3
    %v878 = vperm.slane %v738, 1
    %v879 = vperm.slane %v738, 3
    %v880 = vperm.slane %v740, 1
    %v881 = vperm.slane %v740, 3
    %v882 = vperm.slane %v742, 1
    %v883 = vperm.slane %v742, 3
    %v884 = vperm.slane %v743, 1
    %v885 = vperm.slane %v743, 3
    %v886 = vperm.slane %v745, 1
    %v887 = vperm.slane %v745, 3
    %v888 = vperm.slane %v747, 1
    %v889 = vperm.slane %v747, 3
    %v918 = vpack.c.bf16 %v862, %v862
    %v919 = vpack.c.bf16 %v863, %v863
    %v920 = vpack.c.bf16 %v864, %v864
    %v921 = vpack.c.bf16 %v865, %v865
    %v922 = vpack.c.bf16 %v866, %v866
    %v923 = vpack.c.bf16 %v867, %v867
    %v924 = vpack.c.bf16 %v868, %v868
    %v925 = vpack.c.bf16 %v869, %v869
    %v926 = vpack.c.bf16 %v870, %v870
    %v927 = vpack.c.bf16 %v871, %v871
    %v928 = vpack.c.bf16 %v872, %v872
    %v929 = vpack.c.bf16 %v873, %v873
    %v930 = vpack.c.bf16 %v874, %v874
    %v931 = vpack.c.bf16 %v875, %v875
    %v932 = vpack.c.bf16 %v876, %v876
    %v933 = vpack.c.bf16 %v877, %v877
    %v934 = vpack.c.bf16 %v878, %v878
    %v935 = vpack.c.bf16 %v879, %v879
    %v936 = vpack.c.bf16 %v880, %v880
    %v937 = vpack.c.bf16 %v881, %v881
    %v938 = vpack.c.bf16 %v882, %v882
    %v939 = vpack.c.bf16 %v883, %v883
    %v940 = vpack.c.bf16 %v884, %v884
    %v941 = vpack.c.bf16 %v885, %v885
    %v942 = vpack.c.bf16 %v886, %v886
    %v943 = vpack.c.bf16 %v887, %v887
    %v944 = vpack.c.bf16 %v888, %v888
    %v945 = vpack.c.bf16 %v889, %v889
    %s946 = scalar_lea.vmem [#allocation2], 112
    %v947 = vld [vmem:[%s946] sm:$0xf]
    %v948 = vld [vmem:[%s946 + $0x4] sm:$0xf]
    %v949 = vld [vmem:[%s946 + $0x8] sm:$0xf]
    %v950 = vld [vmem:[%s946 + $0xc] sm:$0xf]
    %v951 = vld [vmem:[%s946 + $0x10] sm:$0xf]
    %v952 = vld [vmem:[%s946 + $0x14] sm:$0xf]
    %v953 = vld [vmem:[%s946 + $0x18] sm:$0xf]
    %v954 = vld [vmem:[%s946 + $0x1c] sm:$0xf]
    %v955 = vld [vmem:[%s946 + $0x20] sm:$0xf]
    %v956 = vld [vmem:[%s946 + $0x24] sm:$0xf]
    %v957 = vld [vmem:[%s946 + $0x28] sm:$0xf]
    %v958 = vld [vmem:[%s946 + $0x2c] sm:$0xf]
    %v959 = vld [vmem:[%s946 + $0x30] sm:$0xf]
    %v960 = vld [vmem:[%s946 + $0x34] sm:$0xf]
    %v961 = vld [vmem:[%s946 + $0x38] sm:$0xf]
    %v962 = vld [vmem:[%s946 + $0x3c] sm:$0xf]
    %v963 = vld [vmem:[%s946 + $0x40] sm:$0xf]
    %v964 = vld [vmem:[%s946 + $0x44] sm:$0xf]
    %v965 = vld [vmem:[%s946 + $0x48] sm:$0xf]
    %v966 = vld [vmem:[%s946 + $0x4c] sm:$0xf]
    %v967 = vld [vmem:[%s946 + $0x50] sm:$0xf]
    %v968 = vld [vmem:[%s946 + $0x54] sm:$0xf]
    %v969 = vld [vmem:[%s946 + $0x58] sm:$0xf]
    %v970 = vld [vmem:[%s946 + $0x5c] sm:$0xf]
    %v971 = vld [vmem:[%s946 + $0x60] sm:$0xf]
    %v972 = vld [vmem:[%s946 + $0x64] sm:$0xf]
    %v973 = vld [vmem:[%s946 + $0x68] sm:$0xf]
    %v974 = vld [vmem:[%s946 + $0x6c] sm:$0xf]
    %v1003 = vunpack.c.l.b16 %v918
    %v1004 = vunpack.c.l.b16 %v919
    %v1005 = vunpack.c.l.b16 %v920
    %v1006 = vunpack.c.l.b16 %v921
    %v1007 = vunpack.c.l.b16 %v922
    %v1008 = vunpack.c.l.b16 %v923
    %v1009 = vunpack.c.l.b16 %v924
    %v1010 = vunpack.c.l.b16 %v925
    %v1011 = vunpack.c.l.b16 %v926
    %v1012 = vunpack.c.l.b16 %v927
    %v1013 = vunpack.c.l.b16 %v928
    %v1014 = vunpack.c.l.b16 %v929
    %v1015 = vunpack.c.l.b16 %v930
    %v1016 = vunpack.c.l.b16 %v931
    %v1017 = vunpack.c.l.b16 %v932
    %v1018 = vunpack.c.l.b16 %v933
    %v1019 = vunpack.c.l.b16 %v934
    %v1020 = vunpack.c.l.b16 %v935
    %v1021 = vunpack.c.l.b16 %v936
    %v1022 = vunpack.c.l.b16 %v937
    %v1023 = vunpack.c.l.b16 %v938
    %v1024 = vunpack.c.l.b16 %v939
    %v1025 = vunpack.c.l.b16 %v940
    %v1026 = vunpack.c.l.b16 %v941
    %v1027 = vunpack.c.l.b16 %v942
    %v1028 = vunpack.c.l.b16 %v943
    %v1029 = vunpack.c.l.b16 %v944
    %v1030 = vunpack.c.l.b16 %v945
    %v1031 = vrot.slane %v1003, 1
    %v1032 = vsel %vm233, %v1005, %v1031
    %v1033 = vrot.slane %v1007, 7
    %v1034 = vsel %vm236, %v1033, %v1032
    %v1035 = vrot.slane %v1009, 6
    %v1036 = vsel %vm239, %v1035, %v1034
    %v1037 = vrot.slane %v1011, 5
    %v1038 = vsel %vm242, %v1037, %v1036
    %v1039 = vrot.slane %v1013, 4
    %v1040 = vsel %vm245, %v1039, %v1038
    %v1041 = vrot.slane %v1015, 3
    %v1042 = vsel %vm248, %v1041, %v1040
    %v1043 = vrot.slane %v1017, 2
    %v1044 = vsel %vm251, %v1043, %v1042
    %v1045 = vrot.slane %v1004, 1
    %v1046 = vsel %vm233, %v1006, %v1045
    %v1047 = vrot.slane %v1008, 7
    %v1048 = vsel %vm236, %v1047, %v1046
    %v1049 = vrot.slane %v1010, 6
    %v1050 = vsel %vm239, %v1049, %v1048
    %v1051 = vrot.slane %v1012, 5
    %v1052 = vsel %vm242, %v1051, %v1050
    %v1053 = vrot.slane %v1014, 4
    %v1054 = vsel %vm245, %v1053, %v1052
    %v1055 = vrot.slane %v1016, 3
    %v1056 = vsel %vm248, %v1055, %v1054
    %v1057 = vrot.slane %v1018, 2
    %v1058 = vsel %vm251, %v1057, %v1056
    %v1059 = vrot.slane %v1019, 1
    %v1060 = vsel %vm233, %v1021, %v1059
    %v1061 = vrot.slane %v1023, 7
    %v1062 = vsel %vm236, %v1061, %v1060
    %v1063 = vrot.slane %v1025, 6
    %v1064 = vsel %vm239, %v1063, %v1062
    %v1065 = vrot.slane %v1027, 5
    %v1066 = vsel %vm242, %v1065, %v1064
    %v1067 = vrot.slane %v1029, 4
    %v1068 = vsel %vm245, %v1067, %v1066
    %v1069 = vrot.slane %v1020, 1
    %v1070 = vsel %vm233, %v1022, %v1069
    %v1071 = vrot.slane %v1024, 7
    %v1072 = vsel %vm236, %v1071, %v1070
    %v1073 = vrot.slane %v1026, 6
    %v1074 = vsel %vm239, %v1073, %v1072
    %v1075 = vrot.slane %v1028, 5
    %v1076 = vsel %vm242, %v1075, %v1074
    %v1077 = vrot.slane %v1030, 4
    %v1078 = vsel %vm245, %v1077, %v1076
    %v1079 = vpack.c.b16 %v1068, %v1044
    %v1080 = vpack.c.b16 %v1078, %v1058
    %v1110 = vunpack.c.l.b16 %v947
    %v1111 = vunpack.c.l.b16 %v948
    %v1112 = vunpack.c.l.b16 %v949
    %v1113 = vunpack.c.l.b16 %v950
    %v1114 = vunpack.c.l.b16 %v951
    %v1115 = vunpack.c.l.b16 %v952
    %v1116 = vunpack.c.l.b16 %v953
    %v1117 = vunpack.c.l.b16 %v954
    %v1118 = vunpack.c.l.b16 %v955
    %v1119 = vunpack.c.l.b16 %v956
    %v1120 = vunpack.c.l.b16 %v957
    %v1121 = vunpack.c.l.b16 %v958
    %v1122 = vunpack.c.l.b16 %v959
    %v1123 = vunpack.c.l.b16 %v960
    %v1124 = vunpack.c.l.b16 %v961
    %v1125 = vunpack.c.l.b16 %v962
    %v1126 = vunpack.c.l.b16 %v963
    %v1127 = vunpack.c.l.b16 %v964
    %v1128 = vunpack.c.l.b16 %v965
    %v1129 = vunpack.c.l.b16 %v966
    %v1130 = vunpack.c.l.b16 %v967
    %v1131 = vunpack.c.l.b16 %v968
    %v1132 = vunpack.c.l.b16 %v969
    %v1133 = vunpack.c.l.b16 %v970
    %v1134 = vunpack.c.l.b16 %v971
    %v1135 = vunpack.c.l.b16 %v972
    %v1136 = vunpack.c.l.b16 %v973
    %v1137 = vunpack.c.l.b16 %v974
    %v1138 = vpack.c.b16 %v1111, %v1110
    %v1139 = vpack.c.b16 %v1113, %v1112
    %v1140 = vpack.c.b16 %v1115, %v1114
    %v1141 = vpack.c.b16 %v1117, %v1116
    %v1142 = vpack.c.b16 %v1119, %v1118
    %v1143 = vpack.c.b16 %v1121, %v1120
    %v1144 = vpack.c.b16 %v1123, %v1122
    %v1145 = vpack.c.b16 %v1125, %v1124
    %v1146 = vpack.c.b16 %v1127, %v1126
    %v1147 = vpack.c.b16 %v1129, %v1128
    %v1148 = vpack.c.b16 %v1131, %v1130
    %v1149 = vpack.c.b16 %v1133, %v1132
    %v1150 = vpack.c.b16 %v1135, %v1134
    %v1151 = vpack.c.b16 %v1137, %v1136
    %vm1166 = vcmask 785408
    %v1168 = vsel %vm1166, %v1080, 0
    %1170 = vmatpush.bf16.msra.mxu0 %v1145
    %1171 = vmatpush.bf16.msra.mxu0 %v1144
    %1172 = vmatpush.bf16.msra.mxu0 %v1143
    %1173 = vmatpush.bf16.msra.mxu0 %v1142
    %1174 = vmatpush.bf16.msra.mxu0 %v1141
    %1175 = vmatpush.bf16.msra.mxu0 %v1140
    %1176 = vmatpush.bf16.msra.mxu0 %v1139
    %1177 = vmatpush.bf16.msra.mxu0 %v1138
    %1178 = vmatmul.bf16.gmra.mxu0 %v1079
    %v1179 = vpop.f32.mrf.mxu0
    %v1180 = vadd.f32 0.0, %v1179
    %v1181 = vpop.f32.mrf.mxu0
    %v1182 = vadd.f32 0.0, %v1181
    %1183 = vdwg.mxu0
    %1184 = vmatpush.bf16.msra.mxu0 0
    %1185 = vmatpush.bf16.msra.mxu0 0
    %1186 = vmatpush.bf16.msra.mxu0 %v1151
    %1187 = vmatpush.bf16.msra.mxu0 %v1150
    %1188 = vmatpush.bf16.msra.mxu0 %v1149
    %1189 = vmatpush.bf16.msra.mxu0 %v1148
    %1190 = vmatpush.bf16.msra.mxu0 %v1147
    %1191 = vmatpush.bf16.msra.mxu0 %v1146
    %1192 = vmatmul.bf16.gmra.mxu0 %v1168
    %v1193 = vpop.f32.mrf.mxu0
    %v1194 = vadd.f32 %v1180, %v1193
    %v1195 = vpop.f32.mrf.mxu0
    %v1196 = vadd.f32 %v1182, %v1195
    %1197 = vdwg.mxu0
    %v1226 = vunpack.c.l.b16 %v806
    %v1227 = vunpack.c.l.b16 %v807
    %v1228 = vunpack.c.l.b16 %v808
    %v1229 = vunpack.c.l.b16 %v809
    %v1230 = vunpack.c.l.b16 %v810
    %v1231 = vunpack.c.l.b16 %v811
    %v1232 = vunpack.c.l.b16 %v812
    %v1233 = vunpack.c.l.b16 %v813
    %v1234 = vunpack.c.l.b16 %v814
    %v1235 = vunpack.c.l.b16 %v815
    %v1236 = vunpack.c.l.b16 %v816
    %v1237 = vunpack.c.l.b16 %v817
    %v1238 = vunpack.c.l.b16 %v818
    %v1239 = vunpack.c.l.b16 %v819
    %v1240 = vunpack.c.l.b16 %v820
    %v1241 = vunpack.c.l.b16 %v821
    %v1242 = vunpack.c.l.b16 %v822
    %v1243 = vunpack.c.l.b16 %v823
    %v1244 = vunpack.c.l.b16 %v824
    %v1245 = vunpack.c.l.b16 %v825
    %v1246 = vunpack.c.l.b16 %v826
    %v1247 = vunpack.c.l.b16 %v827
    %v1248 = vunpack.c.l.b16 %v828
    %v1249 = vunpack.c.l.b16 %v829
    %v1250 = vunpack.c.l.b16 %v830
    %v1251 = vunpack.c.l.b16 %v831
    %v1252 = vunpack.c.l.b16 %v832
    %v1253 = vunpack.c.l.b16 %v833
    %v1254 = vrot.slane %v1228, 7
    %v1255 = vsel %vm233, %v1254, %v1226
    %v1256 = vrot.slane %v1230, 6
    %v1257 = vsel %vm236, %v1256, %v1255
    %v1258 = vrot.slane %v1232, 5
    %v1259 = vsel %vm239, %v1258, %v1257
    %v1260 = vrot.slane %v1234, 4
    %v1261 = vsel %vm242, %v1260, %v1259
    %v1262 = vrot.slane %v1236, 3
    %v1263 = vsel %vm245, %v1262, %v1261
    %v1264 = vrot.slane %v1238, 2
    %v1265 = vsel %vm248, %v1264, %v1263
    %v1266 = vrot.slane %v1240, 1
    %v1267 = vsel %vm251, %v1266, %v1265
    %v1268 = vrot.slane %v1229, 7
    %v1269 = vsel %vm233, %v1268, %v1227
    %v1270 = vrot.slane %v1231, 6
    %v1271 = vsel %vm236, %v1270, %v1269
    %v1272 = vrot.slane %v1233, 5
    %v1273 = vsel %vm239, %v1272, %v1271
    %v1274 = vrot.slane %v1235, 4
    %v1275 = vsel %vm242, %v1274, %v1273
    %v1276 = vrot.slane %v1237, 3
    %v1277 = vsel %vm245, %v1276, %v1275
    %v1278 = vrot.slane %v1239, 2
    %v1279 = vsel %vm248, %v1278, %v1277
    %v1280 = vrot.slane %v1241, 1
    %v1281 = vsel %vm251, %v1280, %v1279
    %v1282 = vrot.slane %v1244, 7
    %v1283 = vsel %vm233, %v1282, %v1242
    %v1284 = vrot.slane %v1246, 6
    %v1285 = vsel %vm236, %v1284, %v1283
    %v1286 = vrot.slane %v1248, 5
    %v1287 = vsel %vm239, %v1286, %v1285
    %v1288 = vrot.slane %v1250, 4
    %v1289 = vsel %vm242, %v1288, %v1287
    %v1290 = vrot.slane %v1252, 3
    %v1291 = vsel %vm245, %v1290, %v1289
    %v1292 = vrot.slane %v1245, 7
    %v1293 = vsel %vm233, %v1292, %v1243
    %v1294 = vrot.slane %v1247, 6
    %v1295 = vsel %vm236, %v1294, %v1293
    %v1296 = vrot.slane %v1249, 5
    %v1297 = vsel %vm239, %v1296, %v1295
    %v1298 = vrot.slane %v1251, 4
    %v1299 = vsel %vm242, %v1298, %v1297
    %v1300 = vrot.slane %v1253, 3
    %v1301 = vsel %vm245, %v1300, %v1299
    %v1302 = vpack.c.b16 %v1291, %v1267
    %v1303 = vpack.c.b16 %v1301, %v1281
    %v1333 = vunpack.c.l.b16 %v834
    %v1334 = vunpack.c.l.b16 %v835
    %v1335 = vunpack.c.l.b16 %v836
    %v1336 = vunpack.c.l.b16 %v837
    %v1337 = vunpack.c.l.b16 %v838
    %v1338 = vunpack.c.l.b16 %v839
    %v1339 = vunpack.c.l.b16 %v840
    %v1340 = vunpack.c.l.b16 %v841
    %v1341 = vunpack.c.l.b16 %v842
    %v1342 = vunpack.c.l.b16 %v843
    %v1343 = vunpack.c.l.b16 %v844
    %v1344 = vunpack.c.l.b16 %v845
    %v1345 = vunpack.c.l.b16 %v846
    %v1346 = vunpack.c.l.b16 %v847
    %v1347 = vunpack.c.l.b16 %v848
    %v1348 = vunpack.c.l.b16 %v849
    %v1349 = vunpack.c.l.b16 %v850
    %v1350 = vunpack.c.l.b16 %v851
    %v1351 = vunpack.c.l.b16 %v852
    %v1352 = vunpack.c.l.b16 %v853
    %v1353 = vunpack.c.l.b16 %v854
    %v1354 = vunpack.c.l.b16 %v855
    %v1355 = vunpack.c.l.b16 %v856
    %v1356 = vunpack.c.l.b16 %v857
    %v1357 = vunpack.c.l.b16 %v858
    %v1358 = vunpack.c.l.b16 %v859
    %v1359 = vunpack.c.l.b16 %v860
    %v1360 = vunpack.c.l.b16 %v861
    %v1361 = vpack.c.b16 %v1334, %v1333
    %v1362 = vpack.c.b16 %v1336, %v1335
    %v1363 = vpack.c.b16 %v1338, %v1337
    %v1364 = vpack.c.b16 %v1340, %v1339
    %v1365 = vpack.c.b16 %v1342, %v1341
    %v1366 = vpack.c.b16 %v1344, %v1343
    %v1367 = vpack.c.b16 %v1346, %v1345
    %v1368 = vpack.c.b16 %v1348, %v1347
    %v1369 = vpack.c.b16 %v1350, %v1349
    %v1370 = vpack.c.b16 %v1352, %v1351
    %v1371 = vpack.c.b16 %v1354, %v1353
    %v1372 = vpack.c.b16 %v1356, %v1355
    %v1373 = vpack.c.b16 %v1358, %v1357
    %v1374 = vpack.c.b16 %v1360, %v1359
    %v1390 = vsel %vm1166, %v1303, 0
    %1392 = vmatpush.bf16.msra.mxu0 %v1368
    %1393 = vmatpush.bf16.msra.mxu0 %v1367
    %1394 = vmatpush.bf16.msra.mxu0 %v1366
    %1395 = vmatpush.bf16.msra.mxu0 %v1365
    %1396 = vmatpush.bf16.msra.mxu0 %v1364
    %1397 = vmatpush.bf16.msra.mxu0 %v1363
    %1398 = vmatpush.bf16.msra.mxu0 %v1362
    %1399 = vmatpush.bf16.msra.mxu0 %v1361
    %1400 = vmatmul.bf16.gmra.mxu0 %v1302
    %v1401 = vpop.f32.mrf.mxu0
    %v1402 = vadd.f32 %v1194, %v1401
    %v1403 = vpop.f32.mrf.mxu0
    %v1404 = vadd.f32 %v1196, %v1403
    %1405 = vdwg.mxu0
    %1406 = vmatpush.bf16.msra.mxu0 0
    %1407 = vmatpush.bf16.msra.mxu0 0
    %1408 = vmatpush.bf16.msra.mxu0 %v1374
    %1409 = vmatpush.bf16.msra.mxu0 %v1373
    %1410 = vmatpush.bf16.msra.mxu0 %v1372
    %1411 = vmatpush.bf16.msra.mxu0 %v1371
    %1412 = vmatpush.bf16.msra.mxu0 %v1370
    %1413 = vmatpush.bf16.msra.mxu0 %v1369
    %1414 = vmatmul.bf16.gmra.mxu0 %v1390
    %v1415 = vpop.f32.mrf.mxu0
    %v1416 = vadd.f32 %v1402, %v1415
    %v1417 = vpop.f32.mrf.mxu0
    %v1418 = vadd.f32 %v1404, %v1417
    %1419 = vdwg.mxu0
    %v1420 = vperm.slane %v735, 0
    %v1421 = vperm.slane %v735, 2
    %v1422 = vperm.slane %v749, 0
    %v1423 = vperm.slane %v749, 2
    %v1428 = vpack.c.bf16 %v1420, %v1420
    %v1429 = vpack.c.bf16 %v1421, %v1421
    %v1430 = vpack.c.bf16 %v1422, %v1422
    %v1431 = vpack.c.bf16 %v1423, %v1423
    %s1432 = scalar_lea.vmem [#allocation2], 224
    %v1433 = vld [vmem:[%s1432] sm:$0xf]
    %v1434 = vld [vmem:[%s1432 + $0x4] sm:$0xf]
    %v1435 = vld [vmem:[%s1432 + $0x8] sm:$0xf]
    %v1436 = vld [vmem:[%s1432 + $0xc] sm:$0xf]
    %v1437 = vld [vmem:[%s1432 + $0x10] sm:$0xf]
    %v1438 = vld [vmem:[%s1432 + $0x14] sm:$0xf]
    %v1439 = vld [vmem:[%s1432 + $0x18] sm:$0xf]
    %v1440 = vld [vmem:[%s1432 + $0x1c] sm:$0xf]
    %v1441 = vld [vmem:[%s1432 + $0x20] sm:$0xf]
    %v1442 = vld [vmem:[%s1432 + $0x24] sm:$0xf]
    %v1443 = vld [vmem:[%s1432 + $0x28] sm:$0xf]
    %v1444 = vld [vmem:[%s1432 + $0x2c] sm:$0xf]
    %v1445 = vld [vmem:[%s1432 + $0x30] sm:$0xf]
    %v1446 = vld [vmem:[%s1432 + $0x34] sm:$0xf]
    %v1447 = vld [vmem:[%s1432 + $0x38] sm:$0xf]
    %v1448 = vld [vmem:[%s1432 + $0x3c] sm:$0xf]
    %v1449 = vld [vmem:[%s1432 + $0x40] sm:$0xf]
    %v1450 = vld [vmem:[%s1432 + $0x44] sm:$0xf]
    %v1451 = vld [vmem:[%s1432 + $0x48] sm:$0xf]
    %v1452 = vld [vmem:[%s1432 + $0x4c] sm:$0xf]
    %v1453 = vld [vmem:[%s1432 + $0x50] sm:$0xf]
    %v1454 = vld [vmem:[%s1432 + $0x54] sm:$0xf]
    %v1455 = vld [vmem:[%s1432 + $0x58] sm:$0xf]
    %v1456 = vld [vmem:[%s1432 + $0x5c] sm:$0xf]
    %v1457 = vld [vmem:[%s1432 + $0x60] sm:$0xf]
    %v1458 = vld [vmem:[%s1432 + $0x64] sm:$0xf]
    %v1459 = vld [vmem:[%s1432 + $0x68] sm:$0xf]
    %v1460 = vld [vmem:[%s1432 + $0x6c] sm:$0xf]
    %v1465 = vunpack.c.l.b16 %v1428
    %v1466 = vunpack.c.l.b16 %v1429
    %v1467 = vunpack.c.l.b16 %v1430
    %v1468 = vunpack.c.l.b16 %v1431
    %v1469 = vrot.slane %v1230, 7
    %v1470 = vsel %vm233, %v1469, %v1228
    %v1471 = vrot.slane %v1232, 6
    %v1472 = vsel %vm236, %v1471, %v1470
    %v1473 = vrot.slane %v1234, 5
    %v1474 = vsel %vm239, %v1473, %v1472
    %v1475 = vrot.slane %v1236, 4
    %v1476 = vsel %vm242, %v1475, %v1474
    %v1477 = vrot.slane %v1238, 3
    %v1478 = vsel %vm245, %v1477, %v1476
    %v1479 = vrot.slane %v1465, 2
    %v1480 = vsel %vm248, %v1479, %v1478
    %v1481 = vrot.slane %v1242, 1
    %v1482 = vsel %vm251, %v1481, %v1480
    %v1483 = vrot.slane %v1231, 7
    %v1484 = vsel %vm233, %v1483, %v1229
    %v1485 = vrot.slane %v1233, 6
    %v1486 = vsel %vm236, %v1485, %v1484
    %v1487 = vrot.slane %v1235, 5
    %v1488 = vsel %vm239, %v1487, %v1486
    %v1489 = vrot.slane %v1237, 4
    %v1490 = vsel %vm242, %v1489, %v1488
    %v1491 = vrot.slane %v1239, 3
    %v1492 = vsel %vm245, %v1491, %v1490
    %v1493 = vrot.slane %v1466, 2
    %v1494 = vsel %vm248, %v1493, %v1492
    %v1495 = vrot.slane %v1243, 1
    %v1496 = vsel %vm251, %v1495, %v1494
    %v1497 = vrot.slane %v1246, 7
    %v1498 = vsel %vm233, %v1497, %v1244
    %v1499 = vrot.slane %v1248, 6
    %v1500 = vsel %vm236, %v1499, %v1498
    %v1501 = vrot.slane %v1250, 5
    %v1502 = vsel %vm239, %v1501, %v1500
    %v1503 = vrot.slane %v1252, 4
    %v1504 = vsel %vm242, %v1503, %v1502
    %v1505 = vrot.slane %v1467, 3
    %v1506 = vsel %vm245, %v1505, %v1504
    %v1507 = vrot.slane %v1247, 7
    %v1508 = vsel %vm233, %v1507, %v1245
    %v1509 = vrot.slane %v1249, 6
    %v1510 = vsel %vm236, %v1509, %v1508
    %v1511 = vrot.slane %v1251, 5
    %v1512 = vsel %vm239, %v1511, %v1510
    %v1513 = vrot.slane %v1253, 4
    %v1514 = vsel %vm242, %v1513, %v1512
    %v1515 = vrot.slane %v1468, 3
    %v1516 = vsel %vm245, %v1515, %v1514
    %v1517 = vpack.c.b16 %v1506, %v1482
    %v1518 = vpack.c.b16 %v1516, %v1496
    %v1548 = vunpack.c.l.b16 %v1433
    %v1549 = vunpack.c.l.b16 %v1434
    %v1550 = vunpack.c.l.b16 %v1435
    %v1551 = vunpack.c.l.b16 %v1436
    %v1552 = vunpack.c.l.b16 %v1437
    %v1553 = vunpack.c.l.b16 %v1438
    %v1554 = vunpack.c.l.b16 %v1439
    %v1555 = vunpack.c.l.b16 %v1440
    %v1556 = vunpack.c.l.b16 %v1441
    %v1557 = vunpack.c.l.b16 %v1442
    %v1558 = vunpack.c.l.b16 %v1443
    %v1559 = vunpack.c.l.b16 %v1444
    %v1560 = vunpack.c.l.b16 %v1445
    %v1561 = vunpack.c.l.b16 %v1446
    %v1562 = vunpack.c.l.b16 %v1447
    %v1563 = vunpack.c.l.b16 %v1448
    %v1564 = vunpack.c.l.b16 %v1449
    %v1565 = vunpack.c.l.b16 %v1450
    %v1566 = vunpack.c.l.b16 %v1451
    %v1567 = vunpack.c.l.b16 %v1452
    %v1568 = vunpack.c.l.b16 %v1453
    %v1569 = vunpack.c.l.b16 %v1454
    %v1570 = vunpack.c.l.b16 %v1455
    %v1571 = vunpack.c.l.b16 %v1456
    %v1572 = vunpack.c.l.b16 %v1457
    %v1573 = vunpack.c.l.b16 %v1458
    %v1574 = vunpack.c.l.b16 %v1459
    %v1575 = vunpack.c.l.b16 %v1460
    %v1576 = vpack.c.b16 %v1549, %v1548
    %v1577 = vpack.c.b16 %v1551, %v1550
    %v1578 = vpack.c.b16 %v1553, %v1552
    %v1579 = vpack.c.b16 %v1555, %v1554
    %v1580 = vpack.c.b16 %v1557, %v1556
    %v1581 = vpack.c.b16 %v1559, %v1558
    %v1582 = vpack.c.b16 %v1561, %v1560
    %v1583 = vpack.c.b16 %v1563, %v1562
    %v1584 = vpack.c.b16 %v1565, %v1564
    %v1585 = vpack.c.b16 %v1567, %v1566
    %v1586 = vpack.c.b16 %v1569, %v1568
    %v1587 = vpack.c.b16 %v1571, %v1570
    %v1588 = vpack.c.b16 %v1573, %v1572
    %v1589 = vpack.c.b16 %v1575, %v1574
    %v1605 = vsel %vm1166, %v1518, 0
    %1607 = vmatpush.bf16.msra.mxu0 %v1583
    %1608 = vmatpush.bf16.msra.mxu0 %v1582
    %1609 = vmatpush.bf16.msra.mxu0 %v1581
    %1610 = vmatpush.bf16.msra.mxu0 %v1580
    %1611 = vmatpush.bf16.msra.mxu0 %v1579
    %1612 = vmatpush.bf16.msra.mxu0 %v1578
    %1613 = vmatpush.bf16.msra.mxu0 %v1577
    %1614 = vmatpush.bf16.msra.mxu0 %v1576
    %1615 = vmatmul.bf16.gmra.mxu0 %v1517
    %v1616 = vpop.f32.mrf.mxu0
    %v1617 = vadd.f32 0.0, %v1616
    %v1618 = vpop.f32.mrf.mxu0
    %v1619 = vadd.f32 0.0, %v1618
    %1620 = vdwg.mxu0
    %1621 = vmatpush.bf16.msra.mxu0 0
    %1622 = vmatpush.bf16.msra.mxu0 0
    %1623 = vmatpush.bf16.msra.mxu0 %v1589
    %1624 = vmatpush.bf16.msra.mxu0 %v1588
    %1625 = vmatpush.bf16.msra.mxu0 %v1587
    %1626 = vmatpush.bf16.msra.mxu0 %v1586
    %1627 = vmatpush.bf16.msra.mxu0 %v1585
    %1628 = vmatpush.bf16.msra.mxu0 %v1584
    %1629 = vmatmul.bf16.gmra.mxu0 %v1605
    %v1630 = vpop.f32.mrf.mxu0
    %v1631 = vadd.f32 %v1617, %v1630
    %v1632 = vpop.f32.mrf.mxu0
    %v1633 = vadd.f32 %v1619, %v1632
    %1634 = vdwg.mxu0
    %v1635 = vadd.f32 %v1416, %v1631
    %v1636 = vadd.f32 %v1418, %v1633
    %v1637 = vld [vmem:[%s5] sm:$0x1]
    %v1639 = vperm.slane %v1637, 0
    %v1641 = vadd.f32 %v1635, %v1639
    %v1642 = vadd.f32 %v1636, %v1639
    %v1643 = vmax.f32 %v1641, 0.0
    %v1644 = vmax.f32 %v1642, 0.0
    %v1647 = vrot.slane %v1643, 1
    %v1648 = vrot.slane %v1643, 2
    %v1649 = vrot.slane %v1643, 3
    %v1650 = vrot.slane %v1643, 4
    %v1651 = vrot.slane %v1643, 5
    %v1652 = vrot.slane %v1643, 6
    %v1653 = vrot.slane %v1643, 7
    %v1654 = vrot.slane %v1644, 1
    %v1655 = vrot.slane %v1644, 2
    %v1656 = vrot.slane %v1644, 3
    %v1657 = vrot.slane %v1644, 4
    %v1658 = vrot.slane %v1644, 5
    %s1659 = scalar_lea.vmem [#allocation1], 1
    %1660 = vst [vmem:[%s1659] ss:$9 sm:$0xff] %v1643
    %s1661 = scalar_lea.vmem [#allocation1], 2
    %1662 = vst [vmem:[%s1661] ss:$9 sm:$0xff] %v1647
    %s1663 = scalar_lea.vmem [#allocation1], 3
    %1664 = vst [vmem:[%s1663] ss:$9 sm:$0xff] %v1648
    %s1665 = scalar_lea.vmem [#allocation1], 4
    %1666 = vst [vmem:[%s1665] ss:$9 sm:$0xff] %v1649
    %s1667 = scalar_lea.vmem [#allocation1], 5
    %1668 = vst [vmem:[%s1667] ss:$9 sm:$0xff] %v1650
    %s1669 = scalar_lea.vmem [#allocation1], 6
    %1670 = vst [vmem:[%s1669] ss:$9 sm:$0xff] %v1651
    %s1671 = scalar_lea.vmem [#allocation1], 7
    %1672 = vst [vmem:[%s1671] ss:$9 sm:$0xff] %v1652
    %v1673 = vld [vmem:[#allocation1] sm:$0xff]
    %1674 = vst [vmem:[%s1659] ss:$9 sm:$0xff] %v1653
    %1675 = vst [vmem:[%s1661] ss:$9 sm:$0xff] %v1644
    %1676 = vst [vmem:[%s1663] ss:$9 sm:$0xff] %v1654
    %1677 = vst [vmem:[%s1665] ss:$9 sm:$0xff] %v1655
    %1678 = vst [vmem:[%s1667] ss:$9 sm:$0xff] %v1656
    %1679 = vst [vmem:[%s1669] ss:$9 sm:$0xff] %v1657
    %1680 = vst [vmem:[%s1671] ss:$9 sm:$0xff] %v1658
    %v1681 = vld [vmem:[#allocation1] sm:$0xff]
    %v1684 = vsel %vm63, 0.0, %v1673
    %v1685 = vsel %vm63, 0.0, %v1681
    %v1688 = vrot.slane %v1684, 2
    %v1689 = vrot.slane %v1684, 4
    %v1690 = vrot.slane %v1684, 6
    %v1691 = vrot.slane %v1685, 2
    %v1692 = vrot.slane %v1685, 4
    %v1693 = vrot.slane %v1685, 6
    %v1700 = vpack.c.bf16 %v1684, %v1684
    %v1701 = vpack.c.bf16 %v1688, %v1688
    %v1702 = vpack.c.bf16 %v1689, %v1689
    %v1703 = vpack.c.bf16 %v1690, %v1690
    %v1704 = vpack.c.bf16 %v1685, %v1685
    %v1705 = vpack.c.bf16 %v1691, %v1691
    %v1706 = vpack.c.bf16 %v1692, %v1692
    %v1707 = vpack.c.bf16 %v1693, %v1693
    %v1708 = vld [vmem:[%s3] sm:$0xf]
    %v1709 = vld [vmem:[%s3 + $0x4] sm:$0xf]
    %v1710 = vld [vmem:[%s3 + $0x8] sm:$0xf]
    %v1711 = vld [vmem:[%s3 + $0xc] sm:$0xf]
    %v1712 = vld [vmem:[%s3 + $0x10] sm:$0xf]
    %v1713 = vld [vmem:[%s3 + $0x14] sm:$0xf]
    %v1714 = vld [vmem:[%s3 + $0x18] sm:$0xf]
    %v1715 = vld [vmem:[%s3 + $0x1c] sm:$0xf]
    %v1716 = vld [vmem:[%s3 + $0x20] sm:$0xf]
    %v1717 = vld [vmem:[%s3 + $0x24] sm:$0xf]
    %v1718 = vld [vmem:[%s3 + $0x28] sm:$0xf]
    %v1719 = vld [vmem:[%s3 + $0x2c] sm:$0xf]
    %v1720 = vld [vmem:[%s3 + $0x30] sm:$0xf]
    %v1721 = vld [vmem:[%s3 + $0x34] sm:$0xf]
    %s1722 = scalar_lea.vmem %s3, 56
    %v1723 = vld [vmem:[%s1722] sm:$0xf]
    %v1724 = vld [vmem:[%s1722 + $0x4] sm:$0xf]
    %v1725 = vld [vmem:[%s1722 + $0x8] sm:$0xf]
    %v1726 = vld [vmem:[%s1722 + $0xc] sm:$0xf]
    %v1727 = vld [vmem:[%s1722 + $0x10] sm:$0xf]
    %v1728 = vld [vmem:[%s1722 + $0x14] sm:$0xf]
    %v1729 = vld [vmem:[%s1722 + $0x18] sm:$0xf]
    %v1730 = vld [vmem:[%s1722 + $0x1c] sm:$0xf]
    %v1731 = vld [vmem:[%s1722 + $0x20] sm:$0xf]
    %v1732 = vld [vmem:[%s1722 + $0x24] sm:$0xf]
    %v1733 = vld [vmem:[%s1722 + $0x28] sm:$0xf]
    %v1734 = vld [vmem:[%s1722 + $0x2c] sm:$0xf]
    %v1735 = vld [vmem:[%s1722 + $0x30] sm:$0xf]
    %v1736 = vld [vmem:[%s1722 + $0x34] sm:$0xf]
    %v1745 = vunpack.c.l.b16 %v1700
    %v1746 = vunpack.c.l.b16 %v1701
    %v1747 = vunpack.c.l.b16 %v1702
    %v1748 = vunpack.c.l.b16 %v1703
    %v1749 = vunpack.c.l.b16 %v1704
    %v1750 = vunpack.c.l.b16 %v1705
    %v1751 = vunpack.c.l.b16 %v1706
    %v1752 = vunpack.c.l.b16 %v1707
    %v1753 = vrot.slane %v1745, 1
    %v1754 = vsel %vm233, %v1746, %v1753
    %v1755 = vrot.slane %v1747, 7
    %v1756 = vsel %vm236, %v1755, %v1754
    %v1757 = vrot.slane %v1748, 6
    %v1758 = vsel %vm239, %v1757, %v1756
    %v1759 = vrot.slane %v1749, 5
    %v1760 = vsel %vm242, %v1759, %v1758
    %v1761 = vrot.slane %v1750, 4
    %v1762 = vsel %vm245, %v1761, %v1760
    %v1763 = vrot.slane %v1751, 3
    %v1764 = vsel %vm248, %v1763, %v1762
    %v1765 = vrot.slane %v1752, 2
    %v1766 = vsel %vm251, %v1765, %v1764
    %v1767 = vpack.c.b16 %v1766, %v1766
    %v1782 = vunpack.c.l.b16 %v1723
    %v1783 = vunpack.c.l.b16 %v1724
    %v1784 = vunpack.c.l.b16 %v1725
    %v1785 = vunpack.c.l.b16 %v1726
    %v1786 = vunpack.c.l.b16 %v1727
    %v1787 = vunpack.c.l.b16 %v1728
    %v1788 = vunpack.c.l.b16 %v1729
    %v1789 = vunpack.c.l.b16 %v1730
    %v1790 = vunpack.c.l.b16 %v1731
    %v1791 = vunpack.c.l.b16 %v1732
    %v1792 = vunpack.c.l.b16 %v1733
    %v1793 = vunpack.c.l.b16 %v1734
    %v1794 = vunpack.c.l.b16 %v1735
    %v1795 = vunpack.c.l.b16 %v1736
    %v1796 = vpack.c.b16 %v1783, %v1782
    %v1797 = vpack.c.b16 %v1785, %v1784
    %v1798 = vpack.c.b16 %v1787, %v1786
    %v1799 = vpack.c.b16 %v1789, %v1788
    %v1800 = vpack.c.b16 %v1791, %v1790
    %v1801 = vpack.c.b16 %v1793, %v1792
    %v1802 = vpack.c.b16 %v1795, %v1794
    %vm1810 = vcmask 916480
    %v1812 = vsel %vm1810, %v1767, 0
    %1814 = vmatpush.bf16.msra.mxu0 0
    %1815 = vmatpush.bf16.msra.mxu0 %v1802
    %1816 = vmatpush.bf16.msra.mxu0 %v1801
    %1817 = vmatpush.bf16.msra.mxu0 %v1800
    %1818 = vmatpush.bf16.msra.mxu0 %v1799
    %1819 = vmatpush.bf16.msra.mxu0 %v1798
    %1820 = vmatpush.bf16.msra.mxu0 %v1797
    %1821 = vmatpush.bf16.msra.mxu0 %v1796
    %1822 = vmatmul.bf16.gmra.mxu0 %v1812
    %v1823 = vpop.f32.mrf.mxu0
    %v1824 = vadd.f32 0.0, %v1823
    %v1825 = vpop.f32.mrf.mxu0
    %1826 = vdwg.mxu0
    %v1827 = vrot.slane %v1746, 7
    %v1828 = vsel %vm233, %v1827, %v1745
    %v1829 = vrot.slane %v1747, 6
    %v1830 = vsel %vm236, %v1829, %v1828
    %v1831 = vrot.slane %v1748, 5
    %v1832 = vsel %vm239, %v1831, %v1830
    %v1833 = vrot.slane %v1749, 4
    %v1834 = vsel %vm242, %v1833, %v1832
    %v1835 = vrot.slane %v1750, 3
    %v1836 = vsel %vm245, %v1835, %v1834
    %v1837 = vrot.slane %v1751, 2
    %v1838 = vsel %vm248, %v1837, %v1836
    %v1839 = vrot.slane %v1752, 1
    %v1840 = vsel %vm251, %v1839, %v1838
    %v1841 = vpack.c.b16 %v1840, %v1840
    %v1856 = vunpack.c.l.b16 %v1708
    %v1857 = vunpack.c.l.b16 %v1709
    %v1858 = vunpack.c.l.b16 %v1710
    %v1859 = vunpack.c.l.b16 %v1711
    %v1860 = vunpack.c.l.b16 %v1712
    %v1861 = vunpack.c.l.b16 %v1713
    %v1862 = vunpack.c.l.b16 %v1714
    %v1863 = vunpack.c.l.b16 %v1715
    %v1864 = vunpack.c.l.b16 %v1716
    %v1865 = vunpack.c.l.b16 %v1717
    %v1866 = vunpack.c.l.b16 %v1718
    %v1867 = vunpack.c.l.b16 %v1719
    %v1868 = vunpack.c.l.b16 %v1720
    %v1869 = vunpack.c.l.b16 %v1721
    %v1870 = vpack.c.b16 %v1857, %v1856
    %v1871 = vpack.c.b16 %v1859, %v1858
    %v1872 = vpack.c.b16 %v1861, %v1860
    %v1873 = vpack.c.b16 %v1863, %v1862
    %v1874 = vpack.c.b16 %v1865, %v1864
    %v1875 = vpack.c.b16 %v1867, %v1866
    %v1876 = vpack.c.b16 %v1869, %v1868
    %v1885 = vsel %vm1810, %v1841, 0
    %1887 = vmatpush.bf16.msra.mxu0 0
    %1888 = vmatpush.bf16.msra.mxu0 %v1876
    %1889 = vmatpush.bf16.msra.mxu0 %v1875
    %1890 = vmatpush.bf16.msra.mxu0 %v1874
    %1891 = vmatpush.bf16.msra.mxu0 %v1873
    %1892 = vmatpush.bf16.msra.mxu0 %v1872
    %1893 = vmatpush.bf16.msra.mxu0 %v1871
    %1894 = vmatpush.bf16.msra.mxu0 %v1870
    %1895 = vmatmul.bf16.gmra.mxu0 %v1885
    %v1896 = vpop.f32.mrf.mxu0
    %v1897 = vadd.f32 %v1824, %v1896
    %v1898 = vpop.f32.mrf.mxu0
    %1899 = vdwg.mxu0
    %v1900 = vpack.c.bf16 0.0, 0.0
    %s1901 = scalar_lea.vmem %s3, 112
    %v1902 = vld [vmem:[%s1901] sm:$0xf]
    %v1903 = vld [vmem:[%s1901 + $0x4] sm:$0xf]
    %v1904 = vld [vmem:[%s1901 + $0x8] sm:$0xf]
    %v1905 = vld [vmem:[%s1901 + $0xc] sm:$0xf]
    %v1906 = vld [vmem:[%s1901 + $0x10] sm:$0xf]
    %v1907 = vld [vmem:[%s1901 + $0x14] sm:$0xf]
    %v1908 = vld [vmem:[%s1901 + $0x18] sm:$0xf]
    %v1909 = vld [vmem:[%s1901 + $0x1c] sm:$0xf]
    %v1910 = vld [vmem:[%s1901 + $0x20] sm:$0xf]
    %v1911 = vld [vmem:[%s1901 + $0x24] sm:$0xf]
    %v1912 = vld [vmem:[%s1901 + $0x28] sm:$0xf]
    %v1913 = vld [vmem:[%s1901 + $0x2c] sm:$0xf]
    %v1914 = vld [vmem:[%s1901 + $0x30] sm:$0xf]
    %v1915 = vld [vmem:[%s1901 + $0x34] sm:$0xf]
    %v1917 = vunpack.c.l.b16 %v1900
    %v1918 = vsel %vm233, %v1755, %v1746
    %v1919 = vsel %vm236, %v1757, %v1918
    %v1920 = vrot.slane %v1917, 5
    %v1921 = vsel %vm239, %v1920, %v1919
    %v1922 = vsel %vm242, %v1761, %v1921
    %v1923 = vsel %vm245, %v1763, %v1922
    %v1924 = vsel %vm248, %v1765, %v1923
    %v1925 = vrot.slane %v1917, 1
    %v1926 = vsel %vm251, %v1925, %v1924
    %v1927 = vpack.c.b16 %v1926, %v1926
    %v1942 = vunpack.c.l.b16 %v1902
    %v1943 = vunpack.c.l.b16 %v1903
    %v1944 = vunpack.c.l.b16 %v1904
    %v1945 = vunpack.c.l.b16 %v1905
    %v1946 = vunpack.c.l.b16 %v1906
    %v1947 = vunpack.c.l.b16 %v1907
    %v1948 = vunpack.c.l.b16 %v1908
    %v1949 = vunpack.c.l.b16 %v1909
    %v1950 = vunpack.c.l.b16 %v1910
    %v1951 = vunpack.c.l.b16 %v1911
    %v1952 = vunpack.c.l.b16 %v1912
    %v1953 = vunpack.c.l.b16 %v1913
    %v1954 = vunpack.c.l.b16 %v1914
    %v1955 = vunpack.c.l.b16 %v1915
    %v1956 = vpack.c.b16 %v1943, %v1942
    %v1957 = vpack.c.b16 %v1945, %v1944
    %v1958 = vpack.c.b16 %v1947, %v1946
    %v1959 = vpack.c.b16 %v1949, %v1948
    %v1960 = vpack.c.b16 %v1951, %v1950
    %v1961 = vpack.c.b16 %v1953, %v1952
    %v1962 = vpack.c.b16 %v1955, %v1954
    %v1971 = vsel %vm1810, %v1927, 0
    %1973 = vmatpush.bf16.msra.mxu0 0
    %1974 = vmatpush.bf16.msra.mxu0 %v1962
    %1975 = vmatpush.bf16.msra.mxu0 %v1961
    %1976 = vmatpush.bf16.msra.mxu0 %v1960
    %1977 = vmatpush.bf16.msra.mxu0 %v1959
    %1978 = vmatpush.bf16.msra.mxu0 %v1958
    %1979 = vmatpush.bf16.msra.mxu0 %v1957
    %1980 = vmatpush.bf16.msra.mxu0 %v1956
    %1981 = vmatmul.bf16.gmra.mxu0 %v1971
    %v1982 = vpop.f32.mrf.mxu0
    %v1983 = vadd.f32 0.0, %v1982
    %v1984 = vpop.f32.mrf.mxu0
    %1985 = vdwg.mxu0
    %v1986 = vadd.f32 %v1897, %v1983
    %v1987 = vld [vmem:[%s6] sm:$0x1]
    %v1989 = vperm.slane %v1987, 0
    %v1991 = vadd.f32 %v1986, %v1989
    %v1992 = vmax.f32 %v1991, 0.0
    %v1994 = vrot.slane %v1992, 4
    %vm1996 = vcmask 322560
    %v1997 = vsel %vm1996, %v1992, 0.0
    %v1998 = vrot.slane %v1997, 4
    %v1999 = vadd.f32 %v1997, %v1998
    %v2000 = vrot.slane %v1999, 2
    %v2001 = vadd.f32 %v1999, %v2000
    %v2002 = vrot.slane %v2001, 1
    %v2003 = vadd.f32 %v2001, %v2002
    %v2004 = vsel %vm1996, %v1994, 0.0
    %v2005 = vrot.slane %v2004, 4
    %v2006 = vadd.f32 %v2004, %v2005
    %v2007 = vrot.slane %v2006, 2
    %v2008 = vadd.f32 %v2006, %v2007
    %v2009 = vrot.slane %v2008, 1
    %v2010 = vadd.f32 %v2008, %v2009
    %v2011 = vld [vmem:[%s7] sm:$0xff]
    %v2012 = vld [vmem:[%s7 + $0x8] sm:$0xff]
    %v2013 = vld [vmem:[%s7 + $0x10] sm:$0xff]
    %v2014 = vld [vmem:[%s7 + $0x18] sm:$0xff]
    %v2015 = vld [vmem:[%s7 + $0x20] sm:$0xff]
    %v2018 = vsel %vm233, %v2010, %v2003
    %vm2019 = vcmask 326656
    %v2020 = vsel %vm2019, %v2018, 0
    %2022 = vmatpush.msra.mxu0 0.0
    %2023 = vmatpush.msra.mxu0 0.0
    %2024 = vmatpush.msra.mxu0 0.0
    %2025 = vmatpush.msra.mxu0 0.0
    %2026 = vmatpush.msra.mxu0 0.0
    %2027 = vmatpush.msra.mxu0 0.0
    %2028 = vmatpush.msra.mxu0 0.0
    %2029 = vmatpush.msra.mxu0 0.0
    %2030 = vmatpush.msra.mxu0 0.0
    %2031 = vmatpush.msra.mxu0 0.0
    %2032 = vmatpush.msra.mxu0 0.0
    %2033 = vmatpush.msra.mxu0 %v2015
    %2034 = vmatpush.msra.mxu0 %v2014
    %2035 = vmatpush.msra.mxu0 %v2013
    %2036 = vmatpush.msra.mxu0 %v2012
    %2037 = vmatpush.msra.mxu0 %v2011
    %2038 = vmatmul.f32.gmra.mxu0 %v2020
    %v2039 = vpop.f32.mrf.mxu0
    %v2040 = vadd.f32 0.0, %v2039
    %2041 = vdwg.mxu0
    %vm2042 = vcmask 74752
    %2043 = vst.msk [vmem:[#allocation5] sm:$0x3] %vm2042, %v2040
    // Predicated region
    $region38: #{tpu_custom_call.1} parent=1 // pred_check
      _
    $region39: #{tpu_custom_call.1} parent=1 // pred_check_branch
      %2045 = sbr.rel (0) target = $region41
    $region40: #{tpu_custom_call.1} parent=1 // pred_region
      %2047 = vsyncadd [#allocation4], 0
      %s2049 = sshll.u32 [#allocation5], 4
      %s2050 = int_to_ptr.vmem [resolvable:$true] %s2049
      %s2051 = sshll.u32 %s8, 4
      %s2052 = int_to_ptr.hbm [resolvable:$true] %s2051
      %2054 = dma.vmem_to_hbm [thread:$0]  %s2050, 32, %s2052, [#allocation4]
    $region41: #{tpu_custom_call.1} parent=1 // pred_fallthru
      _
    // Predicated region
    $region42: #{tpu_custom_call.1} parent=1 // pred_check
      _
    $region43: #{tpu_custom_call.1} parent=1 // pred_check_branch
      %2056 = sbr.rel (0) target = $region45
    $region44: #{tpu_custom_call.1} parent=1 // pred_region
      %2058 = dma.done [#allocation4], 32
    $region45: #{tpu_custom_call.1} parent=1 // pred_fallthru
      _
    %2059 = vsyncpa [#allocation3], 1
    %2060 = vsyncpa [#allocation4], 1

</llo_original>
